<compile_context>
chip_gen: v5e
topology: v5e:2x2
jax: 0.10.0
libtpu: 0.0.40
codegen_flags: <defaults>
</compile_context>

<pallas_src>
import jax
import jax.numpy as jnp
import numpy as np
from jax import lax
from jax.experimental import pallas as pl
from jax.experimental.pallas import tpu as pltpu

PREC = lax.Precision.HIGHEST  # pinned so kernel & pure-JAX reference agree numerically


# ----------------------------------------------------------------------------
# Pallas kernel: full Model.forward in one invocation.
# ----------------------------------------------------------------------------
def ealstm_model_kernel(xd_ref, xs_ref, wih_ref, whh_ref, wsh_ref,
                        bias_ref, bias_s_ref, fcw_ref, fcb_ref,
                        out_ref, hn_ref, cn_ref, xw_scr):
    # xd_ref   : (B*T, F)   dynamic features, row index = b*T + t (free reshape of (B,T,F))
    # xs_ref   : (B, S)     static features
    # wih_ref  : (F, 3H)    input weights  (f|o|g fused)
    # whh_ref  : (H, 3H)    recurrent weights (f|o|g fused)
    # wsh_ref  : (S, H)     static-gate weights
    # bias_ref : (1, 3H)    bias ; bias_s_ref: (1, H) ; fcw_ref: (1, H) ; fcb_ref: (1, 1)
    # out_ref  : (B, T)     fc(h_t)              (output)
    # hn_ref   : (B, T*H)   hidden states, lane-dense (output; reshaped outside)
    # cn_ref   : (B, T*H)   cell states,   lane-dense (output; reshaped outside)
    # xw_scr   : (B*T, 3H)  VMEM scratch for the hoisted input projection
    B, _ = xs_ref.shape
    H = whh_ref.shape[0]
    T = xd_ref.shape[0] // B

    # --- one-time work (off the recurrent carry chain) ------------------------
    # static-feature modulated input gate: i = sigmoid(x_s @ W_sh + bias_s)
    i_gate = jax.nn.sigmoid(
        jnp.dot(xs_ref[...], wsh_ref[...], precision=PREC,
                preferred_element_type=jnp.float32) + bias_s_ref[...])

    # input projection + bias for ALL timesteps in one MXU matmul, into VMEM scratch
    xw_scr[...] = (jnp.dot(xd_ref[...], wih_ref[...], precision=PREC,
                           preferred_element_type=jnp.float32) + bias_ref[...])

    w_hh = whh_ref[...]          # (H, 3H), loaded once
    fc_w = fcw_ref[...]          # (1, H)

    # --- recurrence (true serial dependence h -> c -> h) ----------------------
    h = jnp.zeros((B, H), jnp.float32)
    c = jnp.zeros((B, H), jnp.float32)
    h_cols, c_cols, o_cols = [], [], []
    # T is static & small -> Python loop = full unroll with static slice offsets.
    # TODO(synk): for production sizes (T~365, B>=256, H>=128) restructure to a
    # T-chunked grid with streaming BlockSpecs + scratch-carried (h, c) and a
    # bounded-unroll fori_loop; split batch over the 2nd TensorCore on v7x.
    for t in range(T):
        # per-step input contribution: rows {b*T + t} of the scratch (strided load)
        x_t = xw_scr[pl.ds(t, B, stride=T), :]                        # (B, 3H)
        # single fused MXU push per step on the carry chain: (B,H) @ (H,3H)
        gates = x_t + jnp.dot(h, w_hh, precision=PREC,
                              preferred_element_type=jnp.float32)     # (B, 3H)
        sig_fo = jax.nn.sigmoid(gates[:, :2 * H])   # ONE fused EUP push for f|o
        f = sig_fo[:, :H]
        o = sig_fo[:, H:]
        g = gates[:, 2 * H:]
        c = f * c + i_gate * jnp.tanh(g)
        h = o * jnp.tanh(c)
        h_cols.append(h)
        c_cols.append(c)
        # fc head (dropout p=0.0 is identity): lane reduction, off the carry chain
        o_cols.append(jnp.sum(h * fc_w, axis=1, keepdims=True))       # (B, 1)

    # --- lane-dense output stores (one dense store per output) ----------------
    hn_ref[...] = jnp.concatenate(h_cols, axis=1)                     # (B, T*H)
    cn_ref[...] = jnp.concatenate(c_cols, axis=1)                     # (B, T*H)
    out_ref[...] = jnp.concatenate(o_cols, axis=1) + fcb_ref[...]     # (B, T)


# ----------------------------------------------------------------------------
# Wrapper: free reshapes only (no transposes, no extra XLA matmuls) + pallas_call
# ----------------------------------------------------------------------------
@jax.jit
def model_forward(x_d, x_s, params):
    """x_d: [B, T, F], x_s: [B, S]  ->  (out [B,T,1], h_n [B,T,H], c_n [B,T,H])."""
    w_ih = params["weight_ih"]     # (F, 3H)
    w_hh = params["weight_hh"]     # (H, 3H)
    w_sh = params["weight_sh"]     # (S, H)
    bias = params["bias"]          # (3H,)
    bias_s = params["bias_s"]      # (H,)
    fc_w = params["fc_w"]          # (1, H)
    fc_b = params["fc_b"]          # (1,)

    B, T, F = x_d.shape
    S = x_s.shape[1]
    H = w_hh.shape[0]

    # free, contiguous reshapes only
    xd_flat = x_d.reshape(B * T, F)
    bias2 = bias.reshape(1, 3 * H)
    bias_s2 = bias_s.reshape(1, H)
    fc_w2 = fc_w.reshape(1, H)
    fc_b2 = fc_b.reshape(1, 1)

    grid_spec = pltpu.PrefetchScalarGridSpec(
        num_scalar_prefetch=0,
        grid=(1,),                                   # whole forward pass = one invocation
        in_specs=[
            pl.BlockSpec((B * T, F), lambda i: (0, 0)),     # x_d (flattened)
            pl.BlockSpec((B, S), lambda i: (0, 0)),         # x_s
            pl.BlockSpec((F, 3 * H), lambda i: (0, 0)),     # W_ih
            pl.BlockSpec((H, 3 * H), lambda i: (0, 0)),     # W_hh
            pl.BlockSpec((S, H), lambda i: (0, 0)),         # W_sh
            pl.BlockSpec((1, 3 * H), lambda i: (0, 0)),     # bias
            pl.BlockSpec((1, H), lambda i: (0, 0)),         # bias_s
            pl.BlockSpec((1, H), lambda i: (0, 0)),         # fc_w
            pl.BlockSpec((1, 1), lambda i: (0, 0)),         # fc_b
        ],
        out_specs=[
            pl.BlockSpec((B, T), lambda i: (0, 0)),         # out (pre-squeeze)
            pl.BlockSpec((B, T * H), lambda i: (0, 0)),     # h_n, lane-dense
            pl.BlockSpec((B, T * H), lambda i: (0, 0)),     # c_n, lane-dense
        ],
        scratch_shapes=[pltpu.VMEM((B * T, 3 * H), jnp.float32)],
    )

    out2d, hn2d, cn2d = pl.pallas_call(
        ealstm_model_kernel,
        out_shape=(
            jax.ShapeDtypeStruct((B, T), jnp.float32),
            jax.ShapeDtypeStruct((B, T * H), jnp.float32),
            jax.ShapeDtypeStruct((B, T * H), jnp.float32),
        ),
        grid_spec=grid_spec,
        compiler_params=pltpu.CompilerParams(
            dimension_semantics=("arbitrary",),
        ),
    )(xd_flat, x_s, w_ih, w_hh, w_sh, bias2, bias_s2, fc_w2, fc_b2)

    # (B, T*H) is already batch-first and contiguous -> reshape is free
    h_n = hn2d.reshape(B, T, H)
    c_n = cn2d.reshape(B, T, H)
    out = out2d[..., None]                                            # (B, T, 1)
    return out, h_n, c_n


# ----------------------------------------------------------------------------
# Pure-JAX reference (mirrors the PyTorch forward), precision pinned to match
# ----------------------------------------------------------------------------
def model_forward_ref(x_d, x_s, params):
    w_ih, w_hh, w_sh = params["weight_ih"], params["weight_hh"], params["weight_sh"]
    bias, bias_s = params["bias"], params["bias_s"]
    fc_w, fc_b = params["fc_w"], params["fc_b"]
    B, T, F = x_d.shape
    H = w_hh.shape[0]

    i = jax.nn.sigmoid(jnp.dot(x_s, w_sh, precision=PREC) + bias_s)

    def step(carry, x_t):
        h, c = carry
        gates = (jnp.dot(h, w_hh, precision=PREC)
                 + jnp.dot(x_t, w_ih, precision=PREC) + bias)
        f, o, g = gates[:, :H], gates[:, H:2 * H], gates[:, 2 * H:]
        c1 = jax.nn.sigmoid(f) * c + i * jnp.tanh(g)
        h1 = jax.nn.sigmoid(o) * jnp.tanh(c1)
        return (h1, c1), (h1, c1)

    init = (jnp.zeros((B, H), jnp.float32), jnp.zeros((B, H), jnp.float32))
    _, (hs, cs) = lax.scan(step, init, jnp.transpose(x_d, (1, 0, 2)))
    h_n = jnp.transpose(hs, (1, 0, 2))
    c_n = jnp.transpose(cs, (1, 0, 2))
    out = jnp.matmul(h_n, fc_w.T, precision=PREC) + fc_b
    return out, h_n, c_n


# ----------------------------------------------------------------------------
# Deterministic parameter init (mirrors EALSTM.reset_parameters / nn.Linear)
# ----------------------------------------------------------------------------
def init_params(key, n_dyn, n_stat, hidden, initial_forget_bias=5):
    k1, k2, k3, k4 = jax.random.split(key, 4)
    orth = jax.nn.initializers.orthogonal()
    weight_ih = orth(k1, (n_dyn, 3 * hidden), jnp.float32)
    weight_sh = orth(k2, (n_stat, hidden), jnp.float32)
    weight_hh = jnp.tile(jnp.eye(hidden, dtype=jnp.float32), (1, 3))   # eye repeated 3x
    bias = jnp.zeros((3 * hidden,), jnp.float32)
    bias = bias.at[:hidden].set(float(initial_forget_bias))
    bias_s = jnp.zeros((hidden,), jnp.float32)
    fc_w = jax.random.normal(k3, (1, hidden), jnp.float32) * (1.0 / np.sqrt(hidden))
    fc_b = jax.random.normal(k4, (1,), jnp.float32) * 0.01
    return dict(weight_ih=weight_ih, weight_hh=weight_hh, weight_sh=weight_sh,
                bias=bias, bias_s=bias_s, fc_w=fc_w, fc_b=fc_b)


if __name__ == "__main__":
    # small shapes consistent with the module: 15 dynamic feats, 7 static feats
    B, T, F, S, H = 8, 8, 15, 7, 32

    key = jax.random.PRNGKey(0)
    kx, ks, kp = jax.random.split(key, 3)
    x_d = jax.random.normal(kx, (B, T, F), jnp.float32)
    x_s = jax.random.normal(ks, (B, S), jnp.float32)
    params = init_params(kp, F, S, H, initial_forget_bias=5)

    out, h_n, c_n = model_forward(x_d, x_s, params)
    jax.block_until_ready((out, h_n, c_n))

    out_r, h_r, c_r = model_forward_ref(x_d, x_s, params)
    np.testing.assert_allclose(np.asarray(h_n), np.asarray(h_r), rtol=1e-4, atol=1e-4)
    np.testing.assert_allclose(np.asarray(c_n), np.asarray(c_r), rtol=1e-4, atol=1e-4)
    np.testing.assert_allclose(np.asarray(out), np.asarray(out_r), rtol=1e-4, atol=1e-4)

    print("KERNEL_OK")
</pallas_src>

<mosaic_0001>
module attributes {stable_mosaic.version = 11 : i64} {
  func.func @ealstm_model_kernel(%arg0: i32, %arg1: memref<64x15xf32, #tpu.memory_space<vmem>>, %arg2: memref<8x7xf32, #tpu.memory_space<vmem>>, %arg3: memref<15x96xf32, #tpu.memory_space<vmem>>, %arg4: memref<32x96xf32, #tpu.memory_space<vmem>>, %arg5: memref<7x32xf32, #tpu.memory_space<vmem>>, %arg6: memref<1x96xf32, #tpu.memory_space<vmem>>, %arg7: memref<1x32xf32, #tpu.memory_space<vmem>>, %arg8: memref<1x32xf32, #tpu.memory_space<vmem>>, %arg9: memref<1x1xf32, #tpu.memory_space<vmem>>, %arg10: memref<8x8xf32, #tpu.memory_space<vmem>>, %arg11: memref<8x256xf32, #tpu.memory_space<vmem>>, %arg12: memref<8x256xf32, #tpu.memory_space<vmem>>, %arg13: memref<64x96xf32, #tpu.memory_space<vmem>>) attributes {dimension_semantics = [#tpu.dimension_semantics<arbitrary>], iteration_bounds = array<i64: 1>, scalar_prefetch = 0 : i64, scratch_operands = 1 : i64, tpu.core_type = #tpu.core_type<tc>, window_params = [{pipeline_mode = #tpu.pipeline_mode<synchronous>, transform_indices = @transform_0, window_bounds = array<i64: 64, 15>}, {pipeline_mode = #tpu.pipeline_mode<synchronous>, transform_indices = @transform_1, window_bounds = array<i64: 8, 7>}, {pipeline_mode = #tpu.pipeline_mode<synchronous>, transform_indices = @transform_2, window_bounds = array<i64: 15, 96>}, {pipeline_mode = #tpu.pipeline_mode<synchronous>, transform_indices = @transform_3, window_bounds = array<i64: 32, 96>}, {pipeline_mode = #tpu.pipeline_mode<synchronous>, transform_indices = @transform_4, window_bounds = array<i64: 7, 32>}, {pipeline_mode = #tpu.pipeline_mode<synchronous>, transform_indices = @transform_5, window_bounds = array<i64: 1, 96>}, {pipeline_mode = #tpu.pipeline_mode<synchronous>, transform_indices = @transform_6, window_bounds = array<i64: 1, 32>}, {pipeline_mode = #tpu.pipeline_mode<synchronous>, transform_indices = @transform_7, window_bounds = array<i64: 1, 32>}, {pipeline_mode = #tpu.pipeline_mode<synchronous>, transform_indices = @transform_8, window_bounds = array<i64: 1, 1>}, {pipeline_mode = #tpu.pipeline_mode<synchronous>, transform_indices = @transform_9, window_bounds = array<i64: 8, 8>}, {pipeline_mode = #tpu.pipeline_mode<synchronous>, transform_indices = @transform_10, window_bounds = array<i64: 8, 256>}, {pipeline_mode = #tpu.pipeline_mode<synchronous>, transform_indices = @transform_11, window_bounds = array<i64: 8, 256>}]} {
    %c0 = arith.constant 0 : index
    %c0_0 = arith.constant 0 : index
    %0 = vector.load %arg2[%c0, %c0_0] : memref<8x7xf32, #tpu.memory_space<vmem>>, vector<8x7xf32>
    %c0_1 = arith.constant 0 : index
    %c0_2 = arith.constant 0 : index
    %1 = vector.load %arg5[%c0_1, %c0_2] : memref<7x32xf32, #tpu.memory_space<vmem>>, vector<7x32xf32>
    %cst = arith.constant dense<0.000000e+00> : vector<8x32xf32>
    %2 = tpu.matmul %0, %1, %cst {dimension_numbers = #tpu.dot_dimension_numbers<[1], [0], [0], [1], [0, 0, 1, 1], [], []>, precision = #tpu.contract_precision<fp32>} : vector<8x7xf32>, vector<7x32xf32>, vector<8x32xf32> -> vector<8x32xf32>
    %c0_3 = arith.constant 0 : index
    %c0_4 = arith.constant 0 : index
    %3 = vector.load %arg7[%c0_3, %c0_4] : memref<1x32xf32, #tpu.memory_space<vmem>>, vector<1x32xf32>
    %4 = vector.broadcast %3 : vector<1x32xf32> to vector<8x32xf32>
    %5 = arith.addf %2, %4 : vector<8x32xf32>
    %6 = arith.negf %5 : vector<8x32xf32>
    %7 = math.exp %6 : vector<8x32xf32>
    %cst_5 = arith.constant 1.000000e+00 : f32
    %8 = vector.broadcast %cst_5 : f32 to vector<8x32xf32>
    %9 = arith.addf %8, %7 : vector<8x32xf32>
    %10 = arith.divf %8, %9 : vector<8x32xf32>
    %c0_6 = arith.constant 0 : index
    %c0_7 = arith.constant 0 : index
    %11 = vector.load %arg1[%c0_6, %c0_7] : memref<64x15xf32, #tpu.memory_space<vmem>>, vector<64x15xf32>
    %c0_8 = arith.constant 0 : index
    %c0_9 = arith.constant 0 : index
    %12 = vector.load %arg3[%c0_8, %c0_9] : memref<15x96xf32, #tpu.memory_space<vmem>>, vector<15x96xf32>
    %cst_10 = arith.constant dense<0.000000e+00> : vector<64x96xf32>
    %13 = tpu.matmul %11, %12, %cst_10 {dimension_numbers = #tpu.dot_dimension_numbers<[1], [0], [0], [1], [0, 0, 1, 1], [], []>, precision = #tpu.contract_precision<fp32>} : vector<64x15xf32>, vector<15x96xf32>, vector<64x96xf32> -> vector<64x96xf32>
    %c0_11 = arith.constant 0 : index
    %c0_12 = arith.constant 0 : index
    %14 = vector.load %arg6[%c0_11, %c0_12] : memref<1x96xf32, #tpu.memory_space<vmem>>, vector<1x96xf32>
    %15 = vector.broadcast %14 : vector<1x96xf32> to vector<64x96xf32>
    %16 = arith.addf %13, %15 : vector<64x96xf32>
    %c0_13 = arith.constant 0 : index
    %c0_14 = arith.constant 0 : index
    %17 = vector.load %arg13[%c0_13, %c0_14] : memref<64x96xf32, #tpu.memory_space<vmem>>, vector<64x96xf32>
    tpu.vector_store %arg13[%c0_13, %c0_14], %16 {strides = array<i32>} : memref<64x96xf32, #tpu.memory_space<vmem>>, vector<64x96xf32>,
    %c0_15 = arith.constant 0 : index
    %c0_16 = arith.constant 0 : index
    %18 = vector.load %arg4[%c0_15, %c0_16] : memref<32x96xf32, #tpu.memory_space<vmem>>, vector<32x96xf32>
    %c0_17 = arith.constant 0 : index
    %c0_18 = arith.constant 0 : index
    %19 = vector.load %arg8[%c0_17, %c0_18] : memref<1x32xf32, #tpu.memory_space<vmem>>, vector<1x32xf32>
    %cst_19 = arith.constant 0.000000e+00 : f32
    %20 = vector.broadcast %cst_19 : f32 to vector<8x32xf32>
    %cst_20 = arith.constant 0.000000e+00 : f32
    %21 = vector.broadcast %cst_20 : f32 to vector<8x32xf32>
    %c0_21 = arith.constant 0 : index
    %c0_22 = arith.constant 0 : index
    %22 = tpu.strided_load %arg13[%c0_21, %c0_22] {strides = array<i32: 8, 1>} : memref<64x96xf32, #tpu.memory_space<vmem>>, vector<8x96xf32>
    %cst_23 = arith.constant dense<0.000000e+00> : vector<8x96xf32>
    %23 = tpu.matmul %20, %18, %cst_23 {dimension_numbers = #tpu.dot_dimension_numbers<[1], [0], [0], [1], [0, 0, 1, 1], [], []>, precision = #tpu.contract_precision<fp32>} : vector<8x32xf32>, vector<32x96xf32>, vector<8x96xf32> -> vector<8x96xf32>
    %24 = arith.addf %22, %23 : vector<8x96xf32>
    %25 = vector.extract_strided_slice %24 {offsets = [0, 0], sizes = [8, 64], strides = [1, 1]} : vector<8x96xf32> to vector<8x64xf32>
    %26 = arith.negf %25 : vector<8x64xf32>
    %27 = math.exp %26 : vector<8x64xf32>
    %cst_24 = arith.constant 1.000000e+00 : f32
    %28 = vector.broadcast %cst_24 : f32 to vector<8x64xf32>
    %29 = arith.addf %28, %27 : vector<8x64xf32>
    %30 = arith.divf %28, %29 : vector<8x64xf32>
    %31 = vector.extract_strided_slice %30 {offsets = [0, 0], sizes = [8, 32], strides = [1, 1]} : vector<8x64xf32> to vector<8x32xf32>
    %32 = vector.extract_strided_slice %30 {offsets = [0, 32], sizes = [8, 32], strides = [1, 1]} : vector<8x64xf32> to vector<8x32xf32>
    %33 = vector.extract_strided_slice %24 {offsets = [0, 64], sizes = [8, 32], strides = [1, 1]} : vector<8x96xf32> to vector<8x32xf32>
    %34 = arith.mulf %31, %21 : vector<8x32xf32>
    %35 = math.tanh %33 : vector<8x32xf32>
    %36 = arith.mulf %10, %35 : vector<8x32xf32>
    %37 = arith.addf %34, %36 : vector<8x32xf32>
    %38 = math.tanh %37 : vector<8x32xf32>
    %39 = arith.mulf %32, %38 : vector<8x32xf32>
    %40 = vector.broadcast %19 : vector<1x32xf32> to vector<8x32xf32>
    %41 = arith.mulf %39, %40 : vector<8x32xf32>
    %cst_25 = arith.constant dense<0.000000e+00> : vector<8xf32>
    %42 = vector.multi_reduction <add>, %41, %cst_25 [1] : vector<8x32xf32> to vector<8xf32>
    %43 = vector.shape_cast %42 : vector<8xf32> to vector<8x1xf32>
    %c1 = arith.constant 1 : index
    %c0_26 = arith.constant 0 : index
    %44 = tpu.strided_load %arg13[%c1, %c0_26] {strides = array<i32: 8, 1>} : memref<64x96xf32, #tpu.memory_space<vmem>>, vector<8x96xf32>
    %cst_27 = arith.constant dense<0.000000e+00> : vector<8x96xf32>
    %45 = tpu.matmul %39, %18, %cst_27 {dimension_numbers = #tpu.dot_dimension_numbers<[1], [0], [0], [1], [0, 0, 1, 1], [], []>, precision = #tpu.contract_precision<fp32>} : vector<8x32xf32>, vector<32x96xf32>, vector<8x96xf32> -> vector<8x96xf32>
    %46 = arith.addf %44, %45 : vector<8x96xf32>
    %47 = vector.extract_strided_slice %46 {offsets = [0, 0], sizes = [8, 64], strides = [1, 1]} : vector<8x96xf32> to vector<8x64xf32>
    %48 = arith.negf %47 : vector<8x64xf32>
    %49 = math.exp %48 : vector<8x64xf32>
    %cst_28 = arith.constant 1.000000e+00 : f32
    %50 = vector.broadcast %cst_28 : f32 to vector<8x64xf32>
    %51 = arith.addf %50, %49 : vector<8x64xf32>
    %52 = arith.divf %50, %51 : vector<8x64xf32>
    %53 = vector.extract_strided_slice %52 {offsets = [0, 0], sizes = [8, 32], strides = [1, 1]} : vector<8x64xf32> to vector<8x32xf32>
    %54 = vector.extract_strided_slice %52 {offsets = [0, 32], sizes = [8, 32], strides = [1, 1]} : vector<8x64xf32> to vector<8x32xf32>
    %55 = vector.extract_strided_slice %46 {offsets = [0, 64], sizes = [8, 32], strides = [1, 1]} : vector<8x96xf32> to vector<8x32xf32>
    %56 = arith.mulf %53, %37 : vector<8x32xf32>
    %57 = math.tanh %55 : vector<8x32xf32>
    %58 = arith.mulf %10, %57 : vector<8x32xf32>
    %59 = arith.addf %56, %58 : vector<8x32xf32>
    %60 = math.tanh %59 : vector<8x32xf32>
    %61 = arith.mulf %54, %60 : vector<8x32xf32>
    %62 = vector.broadcast %19 : vector<1x32xf32> to vector<8x32xf32>
    %63 = arith.mulf %61, %62 : vector<8x32xf32>
    %cst_29 = arith.constant dense<0.000000e+00> : vector<8xf32>
    %64 = vector.multi_reduction <add>, %63, %cst_29 [1] : vector<8x32xf32> to vector<8xf32>
    %65 = vector.shape_cast %64 : vector<8xf32> to vector<8x1xf32>
    %c2 = arith.constant 2 : index
    %c0_30 = arith.constant 0 : index
    %66 = tpu.strided_load %arg13[%c2, %c0_30] {strides = array<i32: 8, 1>} : memref<64x96xf32, #tpu.memory_space<vmem>>, vector<8x96xf32>
    %cst_31 = arith.constant dense<0.000000e+00> : vector<8x96xf32>
    %67 = tpu.matmul %61, %18, %cst_31 {dimension_numbers = #tpu.dot_dimension_numbers<[1], [0], [0], [1], [0, 0, 1, 1], [], []>, precision = #tpu.contract_precision<fp32>} : vector<8x32xf32>, vector<32x96xf32>, vector<8x96xf32> -> vector<8x96xf32>
    %68 = arith.addf %66, %67 : vector<8x96xf32>
    %69 = vector.extract_strided_slice %68 {offsets = [0, 0], sizes = [8, 64], strides = [1, 1]} : vector<8x96xf32> to vector<8x64xf32>
    %70 = arith.negf %69 : vector<8x64xf32>
    %71 = math.exp %70 : vector<8x64xf32>
    %cst_32 = arith.constant 1.000000e+00 : f32
    %72 = vector.broadcast %cst_32 : f32 to vector<8x64xf32>
    %73 = arith.addf %72, %71 : vector<8x64xf32>
    %74 = arith.divf %72, %73 : vector<8x64xf32>
    %75 = vector.extract_strided_slice %74 {offsets = [0, 0], sizes = [8, 32], strides = [1, 1]} : vector<8x64xf32> to vector<8x32xf32>
    %76 = vector.extract_strided_slice %74 {offsets = [0, 32], sizes = [8, 32], strides = [1, 1]} : vector<8x64xf32> to vector<8x32xf32>
    %77 = vector.extract_strided_slice %68 {offsets = [0, 64], sizes = [8, 32], strides = [1, 1]} : vector<8x96xf32> to vector<8x32xf32>
    %78 = arith.mulf %75, %59 : vector<8x32xf32>
    %79 = math.tanh %77 : vector<8x32xf32>
    %80 = arith.mulf %10, %79 : vector<8x32xf32>
    %81 = arith.addf %78, %80 : vector<8x32xf32>
    %82 = math.tanh %81 : vector<8x32xf32>
    %83 = arith.mulf %76, %82 : vector<8x32xf32>
    %84 = vector.broadcast %19 : vector<1x32xf32> to vector<8x32xf32>
    %85 = arith.mulf %83, %84 : vector<8x32xf32>
    %cst_33 = arith.constant dense<0.000000e+00> : vector<8xf32>
    %86 = vector.multi_reduction <add>, %85, %cst_33 [1] : vector<8x32xf32> to vector<8xf32>
    %87 = vector.shape_cast %86 : vector<8xf32> to vector<8x1xf32>
    %c3 = arith.constant 3 : index
    %c0_34 = arith.constant 0 : index
    %88 = tpu.strided_load %arg13[%c3, %c0_34] {strides = array<i32: 8, 1>} : memref<64x96xf32, #tpu.memory_space<vmem>>, vector<8x96xf32>
    %cst_35 = arith.constant dense<0.000000e+00> : vector<8x96xf32>
    %89 = tpu.matmul %83, %18, %cst_35 {dimension_numbers = #tpu.dot_dimension_numbers<[1], [0], [0], [1], [0, 0, 1, 1], [], []>, precision = #tpu.contract_precision<fp32>} : vector<8x32xf32>, vector<32x96xf32>, vector<8x96xf32> -> vector<8x96xf32>
    %90 = arith.addf %88, %89 : vector<8x96xf32>
    %91 = vector.extract_strided_slice %90 {offsets = [0, 0], sizes = [8, 64], strides = [1, 1]} : vector<8x96xf32> to vector<8x64xf32>
    %92 = arith.negf %91 : vector<8x64xf32>
    %93 = math.exp %92 : vector<8x64xf32>
    %cst_36 = arith.constant 1.000000e+00 : f32
    %94 = vector.broadcast %cst_36 : f32 to vector<8x64xf32>
    %95 = arith.addf %94, %93 : vector<8x64xf32>
    %96 = arith.divf %94, %95 : vector<8x64xf32>
    %97 = vector.extract_strided_slice %96 {offsets = [0, 0], sizes = [8, 32], strides = [1, 1]} : vector<8x64xf32> to vector<8x32xf32>
    %98 = vector.extract_strided_slice %96 {offsets = [0, 32], sizes = [8, 32], strides = [1, 1]} : vector<8x64xf32> to vector<8x32xf32>
    %99 = vector.extract_strided_slice %90 {offsets = [0, 64], sizes = [8, 32], strides = [1, 1]} : vector<8x96xf32> to vector<8x32xf32>
    %100 = arith.mulf %97, %81 : vector<8x32xf32>
    %101 = math.tanh %99 : vector<8x32xf32>
    %102 = arith.mulf %10, %101 : vector<8x32xf32>
    %103 = arith.addf %100, %102 : vector<8x32xf32>
    %104 = math.tanh %103 : vector<8x32xf32>
    %105 = arith.mulf %98, %104 : vector<8x32xf32>
    %106 = vector.broadcast %19 : vector<1x32xf32> to vector<8x32xf32>
    %107 = arith.mulf %105, %106 : vector<8x32xf32>
    %cst_37 = arith.constant dense<0.000000e+00> : vector<8xf32>
    %108 = vector.multi_reduction <add>, %107, %cst_37 [1] : vector<8x32xf32> to vector<8xf32>
    %109 = vector.shape_cast %108 : vector<8xf32> to vector<8x1xf32>
    %c4 = arith.constant 4 : index
    %c0_38 = arith.constant 0 : index
    %110 = tpu.strided_load %arg13[%c4, %c0_38] {strides = array<i32: 8, 1>} : memref<64x96xf32, #tpu.memory_space<vmem>>, vector<8x96xf32>
    %cst_39 = arith.constant dense<0.000000e+00> : vector<8x96xf32>
    %111 = tpu.matmul %105, %18, %cst_39 {dimension_numbers = #tpu.dot_dimension_numbers<[1], [0], [0], [1], [0, 0, 1, 1], [], []>, precision = #tpu.contract_precision<fp32>} : vector<8x32xf32>, vector<32x96xf32>, vector<8x96xf32> -> vector<8x96xf32>
    %112 = arith.addf %110, %111 : vector<8x96xf32>
    %113 = vector.extract_strided_slice %112 {offsets = [0, 0], sizes = [8, 64], strides = [1, 1]} : vector<8x96xf32> to vector<8x64xf32>
    %114 = arith.negf %113 : vector<8x64xf32>
    %115 = math.exp %114 : vector<8x64xf32>
    %cst_40 = arith.constant 1.000000e+00 : f32
    %116 = vector.broadcast %cst_40 : f32 to vector<8x64xf32>
    %117 = arith.addf %116, %115 : vector<8x64xf32>
    %118 = arith.divf %116, %117 : vector<8x64xf32>
    %119 = vector.extract_strided_slice %118 {offsets = [0, 0], sizes = [8, 32], strides = [1, 1]} : vector<8x64xf32> to vector<8x32xf32>
    %120 = vector.extract_strided_slice %118 {offsets = [0, 32], sizes = [8, 32], strides = [1, 1]} : vector<8x64xf32> to vector<8x32xf32>
    %121 = vector.extract_strided_slice %112 {offsets = [0, 64], sizes = [8, 32], strides = [1, 1]} : vector<8x96xf32> to vector<8x32xf32>
    %122 = arith.mulf %119, %103 : vector<8x32xf32>
    %123 = math.tanh %121 : vector<8x32xf32>
    %124 = arith.mulf %10, %123 : vector<8x32xf32>
    %125 = arith.addf %122, %124 : vector<8x32xf32>
    %126 = math.tanh %125 : vector<8x32xf32>
    %127 = arith.mulf %120, %126 : vector<8x32xf32>
    %128 = vector.broadcast %19 : vector<1x32xf32> to vector<8x32xf32>
    %129 = arith.mulf %127, %128 : vector<8x32xf32>
    %cst_41 = arith.constant dense<0.000000e+00> : vector<8xf32>
    %130 = vector.multi_reduction <add>, %129, %cst_41 [1] : vector<8x32xf32> to vector<8xf32>
    %131 = vector.shape_cast %130 : vector<8xf32> to vector<8x1xf32>
    %c5 = arith.constant 5 : index
    %c0_42 = arith.constant 0 : index
    %132 = tpu.strided_load %arg13[%c5, %c0_42] {strides = array<i32: 8, 1>} : memref<64x96xf32, #tpu.memory_space<vmem>>, vector<8x96xf32>
    %cst_43 = arith.constant dense<0.000000e+00> : vector<8x96xf32>
    %133 = tpu.matmul %127, %18, %cst_43 {dimension_numbers = #tpu.dot_dimension_numbers<[1], [0], [0], [1], [0, 0, 1, 1], [], []>, precision = #tpu.contract_precision<fp32>} : vector<8x32xf32>, vector<32x96xf32>, vector<8x96xf32> -> vector<8x96xf32>
    %134 = arith.addf %132, %133 : vector<8x96xf32>
    %135 = vector.extract_strided_slice %134 {offsets = [0, 0], sizes = [8, 64], strides = [1, 1]} : vector<8x96xf32> to vector<8x64xf32>
    %136 = arith.negf %135 : vector<8x64xf32>
    %137 = math.exp %136 : vector<8x64xf32>
    %cst_44 = arith.constant 1.000000e+00 : f32
    %138 = vector.broadcast %cst_44 : f32 to vector<8x64xf32>
    %139 = arith.addf %138, %137 : vector<8x64xf32>
    %140 = arith.divf %138, %139 : vector<8x64xf32>
    %141 = vector.extract_strided_slice %140 {offsets = [0, 0], sizes = [8, 32], strides = [1, 1]} : vector<8x64xf32> to vector<8x32xf32>
    %142 = vector.extract_strided_slice %140 {offsets = [0, 32], sizes = [8, 32], strides = [1, 1]} : vector<8x64xf32> to vector<8x32xf32>
    %143 = vector.extract_strided_slice %134 {offsets = [0, 64], sizes = [8, 32], strides = [1, 1]} : vector<8x96xf32> to vector<8x32xf32>
    %144 = arith.mulf %141, %125 : vector<8x32xf32>
    %145 = math.tanh %143 : vector<8x32xf32>
    %146 = arith.mulf %10, %145 : vector<8x32xf32>
    %147 = arith.addf %144, %146 : vector<8x32xf32>
    %148 = math.tanh %147 : vector<8x32xf32>
    %149 = arith.mulf %142, %148 : vector<8x32xf32>
    %150 = vector.broadcast %19 : vector<1x32xf32> to vector<8x32xf32>
    %151 = arith.mulf %149, %150 : vector<8x32xf32>
    %cst_45 = arith.constant dense<0.000000e+00> : vector<8xf32>
    %152 = vector.multi_reduction <add>, %151, %cst_45 [1] : vector<8x32xf32> to vector<8xf32>
    %153 = vector.shape_cast %152 : vector<8xf32> to vector<8x1xf32>
    %c6 = arith.constant 6 : index
    %c0_46 = arith.constant 0 : index
    %154 = tpu.strided_load %arg13[%c6, %c0_46] {strides = array<i32: 8, 1>} : memref<64x96xf32, #tpu.memory_space<vmem>>, vector<8x96xf32>
    %cst_47 = arith.constant dense<0.000000e+00> : vector<8x96xf32>
    %155 = tpu.matmul %149, %18, %cst_47 {dimension_numbers = #tpu.dot_dimension_numbers<[1], [0], [0], [1], [0, 0, 1, 1], [], []>, precision = #tpu.contract_precision<fp32>} : vector<8x32xf32>, vector<32x96xf32>, vector<8x96xf32> -> vector<8x96xf32>
    %156 = arith.addf %154, %155 : vector<8x96xf32>
    %157 = vector.extract_strided_slice %156 {offsets = [0, 0], sizes = [8, 64], strides = [1, 1]} : vector<8x96xf32> to vector<8x64xf32>
    %158 = arith.negf %157 : vector<8x64xf32>
    %159 = math.exp %158 : vector<8x64xf32>
    %cst_48 = arith.constant 1.000000e+00 : f32
    %160 = vector.broadcast %cst_48 : f32 to vector<8x64xf32>
    %161 = arith.addf %160, %159 : vector<8x64xf32>
    %162 = arith.divf %160, %161 : vector<8x64xf32>
    %163 = vector.extract_strided_slice %162 {offsets = [0, 0], sizes = [8, 32], strides = [1, 1]} : vector<8x64xf32> to vector<8x32xf32>
    %164 = vector.extract_strided_slice %162 {offsets = [0, 32], sizes = [8, 32], strides = [1, 1]} : vector<8x64xf32> to vector<8x32xf32>
    %165 = vector.extract_strided_slice %156 {offsets = [0, 64], sizes = [8, 32], strides = [1, 1]} : vector<8x96xf32> to vector<8x32xf32>
    %166 = arith.mulf %163, %147 : vector<8x32xf32>
    %167 = math.tanh %165 : vector<8x32xf32>
    %168 = arith.mulf %10, %167 : vector<8x32xf32>
    %169 = arith.addf %166, %168 : vector<8x32xf32>
    %170 = math.tanh %169 : vector<8x32xf32>
    %171 = arith.mulf %164, %170 : vector<8x32xf32>
    %172 = vector.broadcast %19 : vector<1x32xf32> to vector<8x32xf32>
    %173 = arith.mulf %171, %172 : vector<8x32xf32>
    %cst_49 = arith.constant dense<0.000000e+00> : vector<8xf32>
    %174 = vector.multi_reduction <add>, %173, %cst_49 [1] : vector<8x32xf32> to vector<8xf32>
    %175 = vector.shape_cast %174 : vector<8xf32> to vector<8x1xf32>
    %c7 = arith.constant 7 : index
    %c0_50 = arith.constant 0 : index
    %176 = tpu.strided_load %arg13[%c7, %c0_50] {strides = array<i32: 8, 1>} : memref<64x96xf32, #tpu.memory_space<vmem>>, vector<8x96xf32>
    %cst_51 = arith.constant dense<0.000000e+00> : vector<8x96xf32>
    %177 = tpu.matmul %171, %18, %cst_51 {dimension_numbers = #tpu.dot_dimension_numbers<[1], [0], [0], [1], [0, 0, 1, 1], [], []>, precision = #tpu.contract_precision<fp32>} : vector<8x32xf32>, vector<32x96xf32>, vector<8x96xf32> -> vector<8x96xf32>
    %178 = arith.addf %176, %177 : vector<8x96xf32>
    %179 = vector.extract_strided_slice %178 {offsets = [0, 0], sizes = [8, 64], strides = [1, 1]} : vector<8x96xf32> to vector<8x64xf32>
    %180 = arith.negf %179 : vector<8x64xf32>
    %181 = math.exp %180 : vector<8x64xf32>
    %cst_52 = arith.constant 1.000000e+00 : f32
    %182 = vector.broadcast %cst_52 : f32 to vector<8x64xf32>
    %183 = arith.addf %182, %181 : vector<8x64xf32>
    %184 = arith.divf %182, %183 : vector<8x64xf32>
    %185 = vector.extract_strided_slice %184 {offsets = [0, 0], sizes = [8, 32], strides = [1, 1]} : vector<8x64xf32> to vector<8x32xf32>
    %186 = vector.extract_strided_slice %184 {offsets = [0, 32], sizes = [8, 32], strides = [1, 1]} : vector<8x64xf32> to vector<8x32xf32>
    %187 = vector.extract_strided_slice %178 {offsets = [0, 64], sizes = [8, 32], strides = [1, 1]} : vector<8x96xf32> to vector<8x32xf32>
    %188 = arith.mulf %185, %169 : vector<8x32xf32>
    %189 = math.tanh %187 : vector<8x32xf32>
    %190 = arith.mulf %10, %189 : vector<8x32xf32>
    %191 = arith.addf %188, %190 : vector<8x32xf32>
    %192 = math.tanh %191 : vector<8x32xf32>
    %193 = arith.mulf %186, %192 : vector<8x32xf32>
    %194 = vector.broadcast %19 : vector<1x32xf32> to vector<8x32xf32>
    %195 = arith.mulf %193, %194 : vector<8x32xf32>
    %cst_53 = arith.constant dense<0.000000e+00> : vector<8xf32>
    %196 = vector.multi_reduction <add>, %195, %cst_53 [1] : vector<8x32xf32> to vector<8xf32>
    %197 = vector.shape_cast %196 : vector<8xf32> to vector<8x1xf32>
    %198 = tpu.concatenate %39, %61, %83, %105, %127, %149, %171, %193 in 1 : vector<8x32xf32>, vector<8x32xf32>, vector<8x32xf32>, vector<8x32xf32>, vector<8x32xf32>, vector<8x32xf32>, vector<8x32xf32>, vector<8x32xf32> -> vector<8x256xf32>
    %c0_54 = arith.constant 0 : index
    %c0_55 = arith.constant 0 : index
    %199 = vector.load %arg11[%c0_54, %c0_55] : memref<8x256xf32, #tpu.memory_space<vmem>>, vector<8x256xf32>
    tpu.vector_store %arg11[%c0_54, %c0_55], %198 {strides = array<i32>} : memref<8x256xf32, #tpu.memory_space<vmem>>, vector<8x256xf32>,
    %200 = tpu.concatenate %37, %59, %81, %103, %125, %147, %169, %191 in 1 : vector<8x32xf32>, vector<8x32xf32>, vector<8x32xf32>, vector<8x32xf32>, vector<8x32xf32>, vector<8x32xf32>, vector<8x32xf32>, vector<8x32xf32> -> vector<8x256xf32>
    %c0_56 = arith.constant 0 : index
    %c0_57 = arith.constant 0 : index
    %201 = vector.load %arg12[%c0_56, %c0_57] : memref<8x256xf32, #tpu.memory_space<vmem>>, vector<8x256xf32>
    tpu.vector_store %arg12[%c0_56, %c0_57], %200 {strides = array<i32>} : memref<8x256xf32, #tpu.memory_space<vmem>>, vector<8x256xf32>,
    %202 = tpu.concatenate %43, %65, %87, %109, %131, %153, %175, %197 in 1 : vector<8x1xf32>, vector<8x1xf32>, vector<8x1xf32>, vector<8x1xf32>, vector<8x1xf32>, vector<8x1xf32>, vector<8x1xf32>, vector<8x1xf32> -> vector<8x8xf32>
    %c0_58 = arith.constant 0 : index
    %c0_59 = arith.constant 0 : index
    %203 = vector.load %arg9[%c0_58, %c0_59] : memref<1x1xf32, #tpu.memory_space<vmem>>, vector<1x1xf32>
    %204 = vector.broadcast %203 : vector<1x1xf32> to vector<8x8xf32>
    %205 = arith.addf %202, %204 : vector<8x8xf32>
    %c0_60 = arith.constant 0 : index
    %c0_61 = arith.constant 0 : index
    %206 = vector.load %arg10[%c0_60, %c0_61] : memref<8x8xf32, #tpu.memory_space<vmem>>, vector<8x8xf32>
    tpu.vector_store %arg10[%c0_60, %c0_61], %205 {strides = array<i32>} : memref<8x8xf32, #tpu.memory_space<vmem>>, vector<8x8xf32>,
    return
  }
  func.func @transform_0(%arg0: i32) -> (i32, i32) {
    %c0_i32 = arith.constant 0 : i32
    %c0_i32_0 = arith.constant 0 : i32
    %c0_i32_1 = arith.constant 0 : i32
    return %c0_i32, %c0_i32_0 : i32, i32
  }
  func.func @transform_1(%arg0: i32) -> (i32, i32) {
    %c0_i32 = arith.constant 0 : i32
    %c0_i32_0 = arith.constant 0 : i32
    %c0_i32_1 = arith.constant 0 : i32
    return %c0_i32, %c0_i32_0 : i32, i32
  }
  func.func @transform_2(%arg0: i32) -> (i32, i32) {
    %c0_i32 = arith.constant 0 : i32
    %c0_i32_0 = arith.constant 0 : i32
    %c0_i32_1 = arith.constant 0 : i32
    return %c0_i32, %c0_i32_0 : i32, i32
  }
  func.func @transform_3(%arg0: i32) -> (i32, i32) {
    %c0_i32 = arith.constant 0 : i32
    %c0_i32_0 = arith.constant 0 : i32
    %c0_i32_1 = arith.constant 0 : i32
    return %c0_i32, %c0_i32_0 : i32, i32
  }
  func.func @transform_4(%arg0: i32) -> (i32, i32) {
    %c0_i32 = arith.constant 0 : i32
    %c0_i32_0 = arith.constant 0 : i32
    %c0_i32_1 = arith.constant 0 : i32
    return %c0_i32, %c0_i32_0 : i32, i32
  }
  func.func @transform_5(%arg0: i32) -> (i32, i32) {
    %c0_i32 = arith.constant 0 : i32
    %c0_i32_0 = arith.constant 0 : i32
    %c0_i32_1 = arith.constant 0 : i32
    return %c0_i32, %c0_i32_0 : i32, i32
  }
  func.func @transform_6(%arg0: i32) -> (i32, i32) {
    %c0_i32 = arith.constant 0 : i32
    %c0_i32_0 = arith.constant 0 : i32
    %c0_i32_1 = arith.constant 0 : i32
    return %c0_i32, %c0_i32_0 : i32, i32
  }
  func.func @transform_7(%arg0: i32) -> (i32, i32) {
    %c0_i32 = arith.constant 0 : i32
    %c0_i32_0 = arith.constant 0 : i32
    %c0_i32_1 = arith.constant 0 : i32
    return %c0_i32, %c0_i32_0 : i32, i32
  }
  func.func @transform_8(%arg0: i32) -> (i32, i32) {
    %c0_i32 = arith.constant 0 : i32
    %c0_i32_0 = arith.constant 0 : i32
    %c0_i32_1 = arith.constant 0 : i32
    return %c0_i32, %c0_i32_0 : i32, i32
  }
  func.func @transform_9(%arg0: i32) -> (i32, i32) {
    %c0_i32 = arith.constant 0 : i32
    %c0_i32_0 = arith.constant 0 : i32
    %c0_i32_1 = arith.constant 0 : i32
    return %c0_i32, %c0_i32_0 : i32, i32
  }
  func.func @transform_10(%arg0: i32) -> (i32, i32) {
    %c0_i32 = arith.constant 0 : i32
    %c0_i32_0 = arith.constant 0 : i32
    %c0_i32_1 = arith.constant 0 : i32
    return %c0_i32, %c0_i32_0 : i32, i32
  }
  func.func @transform_11(%arg0: i32) -> (i32, i32) {
    %c0_i32 = arith.constant 0 : i32
    %c0_i32_0 = arith.constant 0 : i32
    %c0_i32_1 = arith.constant 0 : i32
    return %c0_i32, %c0_i32_0 : i32, i32
  }
}

</mosaic_0001>

<llo_original>
// kernel: model_forward.1
$region0: #{model_forward.1}
  #allocation0 [shape = 'u32[]', space=smem, size = 0x4, offset = 0x4, fixed_abs, tag = 'smem constant byte address 0x4 - core index']
  #allocation1 [shape = 'u32[72,128]{1,0:T(1,128)}', space=vmem, size = 0x9000, scoped, tag = 'internal scratch']
  #allocation2 [shape = 'f32[64,96]{1,0:T(8,128)}', space=vmem, size = 0x8000, scoped, tag = 'scratch operand']
  #allocation3 [shape = 'f32[1,1]{1,0:T(1,128)S(1)}', space=vmem, size = 0x200, scoped, tag = 'scoped memory for model_forward.1']
  %s0 = inlined_call_operand.hbm [shape: f32[64,15], index: 0, kind: input, shape index: {}]
  %s1 = inlined_call_operand.hbm [shape: f32[8,7], index: 1, kind: input, shape index: {}]
  %s2 = inlined_call_operand.hbm [shape: f32[15,96], index: 2, kind: input, shape index: {}]
  %s3 = inlined_call_operand.hbm [shape: f32[32,96], index: 3, kind: input, shape index: {}]
  %s4 = inlined_call_operand.vmem [shape: f32[7,32], index: 4, kind: input, shape index: {}]
  %s5 = inlined_call_operand.vmem [shape: f32[1,96], index: 5, kind: input, shape index: {}]
  %s6 = inlined_call_operand.vmem [shape: f32[1,32], index: 6, kind: input, shape index: {}]
  %s7 = inlined_call_operand.vmem [shape: f32[1,32], index: 7, kind: input, shape index: {}]
  %s8 = inlined_call_operand.<no memory space> [shape: f32[1,1], index: 8, kind: input, shape index: {}]
  %s9 = inlined_call_operand.hbm [shape: f32[8,8], index: 9, kind: output, shape index: {0}]
  %s10 = inlined_call_operand.vmem [shape: f32[8,256], index: 10, kind: output, shape index: {1}]
  %s11 = inlined_call_operand.vmem [shape: f32[8,256], index: 11, kind: output, shape index: {2}]
  %12 = xla_tuple %s9, %s10, %s11
  %s13 = sld [smem:[#allocation0]]
  $region78: #{model_forward.1} parent=0
    _
  %s15 = ssub.s32 1, %s13
  %s16 = scalar_select 0, %s15, %s13
  %v17 = vstv %s8
  %18 = vst [vmem:[#allocation3] sm:$0x1] %v17
  $region1: #{model_forward.1} parent=0
    #allocation4 [shape = 'u8[32768]{0}', space=vmem, size = 0x8000, scoped, tag = 'input window, operand 0, single buffered']
    #allocation5 [shape = 's32[1]{0}', space=sflag, size = 0x4, scoped, tag = 'scoped memory for model_forward.1']
    #allocation6 [shape = 's32[1]{0}', space=sflag, size = 0x4, scoped, tag = 'scoped memory for model_forward.1']
    #allocation7 [shape = 'u8[4096]{0}', space=vmem, size = 0x1000, scoped, tag = 'input window, operand 1, single buffered']
    #allocation8 [shape = 's32[1]{0}', space=sflag, size = 0x4, scoped, tag = 'scoped memory for model_forward.1']
    #allocation9 [shape = 'u8[8192]{0}', space=vmem, size = 0x2000, scoped, tag = 'input window, operand 2, single buffered']
    #allocation10 [shape = 'u8[16384]{0}', space=vmem, size = 0x4000, scoped, tag = 'input window, operand 3, single buffered']
    #allocation11 [shape = 's32[1]{0}', space=sflag, size = 0x4, scoped, tag = 'scoped memory for model_forward.1']
    #allocation12 [shape = 'u8[4096]{0}', space=vmem, size = 0x1000, scoped, tag = 'output window, operand 0, single buffered']
    %19 = vsyncpa [#allocation5], 0
    %20 = vsyncpa [#allocation8], 0
    %21 = vsyncpa [#allocation11], 0
    %22 = vsyncpa [#allocation6], 0
    // Predicated region
    $region2: #{model_forward.1} parent=1 // pred_check
      _
    $region3: #{model_forward.1} parent=1 // pred_check_branch
      %24 = sbr.rel (0) target = $region5
    $region4: #{model_forward.1} parent=1 // pred_region
      %26 = vsyncadd [#allocation5], 0
      %s27 = sshll.u32 %s0, 4
      %s28 = int_to_ptr.hbm [resolvable:$true] %s27
      %s29 = sshll.u32 [#allocation4], 4
      %s30 = int_to_ptr.vmem [resolvable:$true] %s29
      %35 = dma.hbm_to_vmem [thread:$0]  %s28, 1024, %s30, [#allocation5], 128, 128, 8
    $region5: #{model_forward.1} parent=1 // pred_fallthru
      _
    // Predicated region
    $region6: #{model_forward.1} parent=1 // pred_check
      _
    $region7: #{model_forward.1} parent=1 // pred_check_branch
      %37 = sbr.rel (0) target = $region9
    $region8: #{model_forward.1} parent=1 // pred_region
      %39 = vsyncadd [#allocation8], 0
      %s41 = sshll.u32 %s1, 4
      %s42 = int_to_ptr.hbm [resolvable:$true] %s41
      %s43 = sshll.u32 [#allocation7], 4
      %s44 = int_to_ptr.vmem [resolvable:$true] %s43
      %46 = dma.hbm_to_vmem [thread:$0]  %s42, 128, %s44, [#allocation8]
    $region9: #{model_forward.1} parent=1 // pred_fallthru
      _
    // Predicated region
    $region10: #{model_forward.1} parent=1 // pred_check
      _
    $region11: #{model_forward.1} parent=1 // pred_check_branch
      %48 = sbr.rel (0) target = $region13
    $region12: #{model_forward.1} parent=1 // pred_region
      %50 = vsyncadd [#allocation8], 0
      %s51 = sshll.u32 %s2, 4
      %s52 = int_to_ptr.hbm [resolvable:$true] %s51
      %s53 = sshll.u32 [#allocation9], 4
      %s54 = int_to_ptr.vmem [resolvable:$true] %s53
      %59 = dma.hbm_to_vmem [thread:$0]  %s52, 256, %s54, [#allocation8], 128, 128, 8
    $region13: #{model_forward.1} parent=1 // pred_fallthru
      _
    // Predicated region
    $region14: #{model_forward.1} parent=1 // pred_check
      _
    $region15: #{model_forward.1} parent=1 // pred_check_branch
      %61 = sbr.rel (0) target = $region17
    $region16: #{model_forward.1} parent=1 // pred_region
      %63 = vsyncadd [#allocation11], 0
      %s64 = sshll.u32 %s3, 4
      %s65 = int_to_ptr.hbm [resolvable:$true] %s64
      %s66 = sshll.u32 [#allocation10], 4
      %s67 = int_to_ptr.vmem [resolvable:$true] %s66
      %72 = dma.hbm_to_vmem [thread:$0]  %s65, 512, %s67, [#allocation11], 128, 128, 8
    $region17: #{model_forward.1} parent=1 // pred_fallthru
      _
    // Predicated region
    $region18: #{model_forward.1} parent=1 // pred_check
      _
    $region19: #{model_forward.1} parent=1 // pred_check_branch
      %74 = sbr.rel (0) target = $region21
    $region20: #{model_forward.1} parent=1 // pred_region
      _
    $region21: #{model_forward.1} parent=1 // pred_fallthru
      _
    // Predicated region
    $region22: #{model_forward.1} parent=1 // pred_check
      _
    $region23: #{model_forward.1} parent=1 // pred_check_branch
      %76 = sbr.rel (0) target = $region25
    $region24: #{model_forward.1} parent=1 // pred_region
      _
    $region25: #{model_forward.1} parent=1 // pred_fallthru
      _
    // Predicated region
    $region26: #{model_forward.1} parent=1 // pred_check
      _
    $region27: #{model_forward.1} parent=1 // pred_check_branch
      %78 = sbr.rel (0) target = $region29
    $region28: #{model_forward.1} parent=1 // pred_region
      _
    $region29: #{model_forward.1} parent=1 // pred_fallthru
      _
    // Predicated region
    $region30: #{model_forward.1} parent=1 // pred_check
      _
    $region31: #{model_forward.1} parent=1 // pred_check_branch
      %80 = sbr.rel (0) target = $region33
    $region32: #{model_forward.1} parent=1 // pred_region
      _
    $region33: #{model_forward.1} parent=1 // pred_fallthru
      _
    // Predicated region
    $region34: #{model_forward.1} parent=1 // pred_check
      _
    $region35: #{model_forward.1} parent=1 // pred_check_branch
      %82 = sbr.rel (0) target = $region37
    $region36: #{model_forward.1} parent=1 // pred_region
      _
    $region37: #{model_forward.1} parent=1 // pred_fallthru
      _
    // Predicated region
    $region38: #{model_forward.1} parent=1 // pred_check
      _
    $region39: #{model_forward.1} parent=1 // pred_check_branch
      %84 = sbr.rel (0) target = $region41
    $region40: #{model_forward.1} parent=1 // pred_region
      %86 = dma.done [#allocation5], 1024
    $region41: #{model_forward.1} parent=1 // pred_fallthru
      _
    // Predicated region
    $region42: #{model_forward.1} parent=1 // pred_check
      _
    $region43: #{model_forward.1} parent=1 // pred_check_branch
      %88 = sbr.rel (0) target = $region45
    $region44: #{model_forward.1} parent=1 // pred_region
      %90 = dma.done [#allocation8], 128
    $region45: #{model_forward.1} parent=1 // pred_fallthru
      _
    // Predicated region
    $region46: #{model_forward.1} parent=1 // pred_check
      _
    $region47: #{model_forward.1} parent=1 // pred_check_branch
      %92 = sbr.rel (0) target = $region49
    $region48: #{model_forward.1} parent=1 // pred_region
      %94 = dma.done [#allocation8], 256
    $region49: #{model_forward.1} parent=1 // pred_fallthru
      _
    // Predicated region
    $region50: #{model_forward.1} parent=1 // pred_check
      _
    $region51: #{model_forward.1} parent=1 // pred_check_branch
      %96 = sbr.rel (0) target = $region53
    $region52: #{model_forward.1} parent=1 // pred_region
      %98 = dma.done [#allocation11], 512
    $region53: #{model_forward.1} parent=1 // pred_fallthru
      _
    %v99 = vld [vmem:[#allocation7] sm:$0xff]
    %v100 = vld [vmem:[%s4] sm:$0x7f]
    %v101 = vld [vmem:[%s6] sm:$0x1]
    %v103 = vperm.slane %v101, 0
    %vm105 = vcmask 56320
    %v107 = vsel %vm105, %v99, 0
    %vm109 = vcmask 1046528
    %v111 = vsel %vm109, %v100, 0
    %113 = vmatpush.msra.mxu0 0.0
    %114 = vmatpush.msra.mxu0 0.0
    %115 = vmatpush.msra.mxu0 0.0
    %116 = vmatpush.msra.mxu0 0.0
    %117 = vmatpush.msra.mxu0 0.0
    %118 = vmatpush.msra.mxu0 0.0
    %119 = vmatpush.msra.mxu0 0.0
    %120 = vmatpush.msra.mxu0 0.0
    %121 = vmatpush.msra.mxu0 0.0
    %122 = vmatpush.msra.mxu0 0.0
    %123 = vmatpush.msra.mxu0 0.0
    %124 = vmatpush.msra.mxu0 0.0
    %125 = vmatpush.msra.mxu0 0.0
    %126 = vmatpush.msra.mxu0 0.0
    %127 = vmatpush.msra.mxu0 0.0
    %v128 = vand.u32 %v111, 4294901760
    %129 = vmatpush.msra.mxu0 %v128
    %v130 = vand.u32 %v107, 4294901760
    %v131 = vsub.f32 %v107, %v130
    %v132 = vand.u32 %v131, 4294901760
    %v133 = vsub.f32 %v131, %v132
    %v134 = vand.u32 %v133, 4294901760
    %135 = vmatmul.f32.gmra.mxu0 %v134
    %v136 = vpop.f32.mrf.mxu0
    %v137 = vadd.f32 %v103, %v136
    %138 = vdwg.mxu0
    %139 = vmatpush.msra.mxu0 0.0
    %140 = vmatpush.msra.mxu0 0.0
    %141 = vmatpush.msra.mxu0 0.0
    %142 = vmatpush.msra.mxu0 0.0
    %143 = vmatpush.msra.mxu0 0.0
    %144 = vmatpush.msra.mxu0 0.0
    %145 = vmatpush.msra.mxu0 0.0
    %146 = vmatpush.msra.mxu0 0.0
    %147 = vmatpush.msra.mxu0 0.0
    %148 = vmatpush.msra.mxu0 0.0
    %149 = vmatpush.msra.mxu0 0.0
    %150 = vmatpush.msra.mxu0 0.0
    %151 = vmatpush.msra.mxu0 0.0
    %152 = vmatpush.msra.mxu0 0.0
    %153 = vmatpush.msra.mxu0 0.0
    %v154 = vand.u32 %v111, 4294901760
    %v155 = vsub.f32 %v111, %v154
    %v156 = vand.u32 %v155, 4294901760
    %v157 = vsub.f32 %v155, %v156
    %v158 = vand.u32 %v157, 4294901760
    %159 = vmatpush.msra.mxu0 %v158
    %v160 = vand.u32 %v107, 4294901760
    %161 = vmatmul.f32.gmra.mxu0 %v160
    %v162 = vpop.f32.mrf.mxu0
    %v163 = vadd.f32 %v137, %v162
    %164 = vdwg.mxu0
    %165 = vmatpush.msra.mxu0 0.0
    %166 = vmatpush.msra.mxu0 0.0
    %167 = vmatpush.msra.mxu0 0.0
    %168 = vmatpush.msra.mxu0 0.0
    %169 = vmatpush.msra.mxu0 0.0
    %170 = vmatpush.msra.mxu0 0.0
    %171 = vmatpush.msra.mxu0 0.0
    %172 = vmatpush.msra.mxu0 0.0
    %173 = vmatpush.msra.mxu0 0.0
    %174 = vmatpush.msra.mxu0 0.0
    %175 = vmatpush.msra.mxu0 0.0
    %176 = vmatpush.msra.mxu0 0.0
    %177 = vmatpush.msra.mxu0 0.0
    %178 = vmatpush.msra.mxu0 0.0
    %179 = vmatpush.msra.mxu0 0.0
    %v180 = vand.u32 %v111, 4294901760
    %v181 = vsub.f32 %v111, %v180
    %182 = vmatpush.msra.mxu0 %v181
    %v183 = vand.u32 %v107, 4294901760
    %v184 = vsub.f32 %v107, %v183
    %185 = vmatmul.f32.gmra.mxu0 %v184
    %v186 = vpop.f32.mrf.mxu0
    %v187 = vadd.f32 %v163, %v186
    %188 = vdwg.mxu0
    %189 = vmatpush.msra.mxu0 0.0
    %190 = vmatpush.msra.mxu0 0.0
    %191 = vmatpush.msra.mxu0 0.0
    %192 = vmatpush.msra.mxu0 0.0
    %193 = vmatpush.msra.mxu0 0.0
    %194 = vmatpush.msra.mxu0 0.0
    %195 = vmatpush.msra.mxu0 0.0
    %196 = vmatpush.msra.mxu0 0.0
    %197 = vmatpush.msra.mxu0 0.0
    %198 = vmatpush.msra.mxu0 0.0
    %199 = vmatpush.msra.mxu0 0.0
    %200 = vmatpush.msra.mxu0 0.0
    %201 = vmatpush.msra.mxu0 0.0
    %202 = vmatpush.msra.mxu0 0.0
    %203 = vmatpush.msra.mxu0 0.0
    %v204 = vand.u32 %v111, 4294901760
    %205 = vmatpush.msra.mxu0 %v204
    %v206 = vand.u32 %v107, 4294901760
    %v207 = vsub.f32 %v107, %v206
    %v208 = vand.u32 %v207, 4294901760
    %209 = vmatmul.f32.gmra.mxu0 %v208
    %v210 = vpop.f32.mrf.mxu0
    %v211 = vadd.f32 %v187, %v210
    %212 = vdwg.mxu0
    %213 = vmatpush.msra.mxu0 0.0
    %214 = vmatpush.msra.mxu0 0.0
    %215 = vmatpush.msra.mxu0 0.0
    %216 = vmatpush.msra.mxu0 0.0
    %217 = vmatpush.msra.mxu0 0.0
    %218 = vmatpush.msra.mxu0 0.0
    %219 = vmatpush.msra.mxu0 0.0
    %220 = vmatpush.msra.mxu0 0.0
    %221 = vmatpush.msra.mxu0 0.0
    %222 = vmatpush.msra.mxu0 0.0
    %223 = vmatpush.msra.mxu0 0.0
    %224 = vmatpush.msra.mxu0 0.0
    %225 = vmatpush.msra.mxu0 0.0
    %226 = vmatpush.msra.mxu0 0.0
    %227 = vmatpush.msra.mxu0 0.0
    %v228 = vand.u32 %v111, 4294901760
    %v229 = vsub.f32 %v111, %v228
    %v230 = vand.u32 %v229, 4294901760
    %231 = vmatpush.msra.mxu0 %v230
    %v232 = vand.u32 %v107, 4294901760
    %233 = vmatmul.f32.gmra.mxu0 %v232
    %v234 = vpop.f32.mrf.mxu0
    %v235 = vadd.f32 %v211, %v234
    %236 = vdwg.mxu0
    %237 = vmatpush.msra.mxu0 0.0
    %238 = vmatpush.msra.mxu0 0.0
    %239 = vmatpush.msra.mxu0 0.0
    %240 = vmatpush.msra.mxu0 0.0
    %241 = vmatpush.msra.mxu0 0.0
    %242 = vmatpush.msra.mxu0 0.0
    %243 = vmatpush.msra.mxu0 0.0
    %244 = vmatpush.msra.mxu0 0.0
    %245 = vmatpush.msra.mxu0 0.0
    %246 = vmatpush.msra.mxu0 0.0
    %247 = vmatpush.msra.mxu0 0.0
    %248 = vmatpush.msra.mxu0 0.0
    %249 = vmatpush.msra.mxu0 0.0
    %250 = vmatpush.msra.mxu0 0.0
    %251 = vmatpush.msra.mxu0 0.0
    %v252 = vand.u32 %v111, 4294901760
    %253 = vmatpush.msra.mxu0 %v252
    %v254 = vand.u32 %v107, 4294901760
    %255 = vmatmul.f32.gmra.mxu0 %v254
    %v256 = vpop.f32.mrf.mxu0
    %v257 = vadd.f32 %v235, %v256
    %258 = vdwg.mxu0
    %v259 = vxor.u32 %v257, 2147483648
    %v260 = vmul.f32 %v259, 1.442695
    %v261 = vpow.pop %v260
    %v262 = vadd.f32 %v261, 1.0
    %v263 = vrcp.pop %v262
    %v264 = vmul.f32 %v262, %v263
    %v265 = vsub.f32 1.0, %v264
    %v266 = vmul.f32 %v263, %v265
    %v267 = vadd.f32 %v263, %v266
    %vm268 = vweird.f32 %v262
    %vm269 = vweird.f32 %v263
    %vm270 = vmor %vm268, %vm269
    %v271 = vsel %vm270, %v263, %v267
    %v272 = vand.u32 2147483647, %v262
    %vm273 = vcmp.eq.f32.partialorder %v272, 8.507059e+37
    %v274 = vand.u32 %v262, 2147483648
    %v275 = vor.u32 1.1754944e-38, %v274
    %v276 = vsel %vm273, %v275, %v271
    %v277 = vmul.f32 1.0, %v276
    %v278 = vld [vmem:[#allocation4] sm:$0xff]
    %v279 = vld [vmem:[#allocation4 + $0x8] sm:$0xff]
    %v280 = vld [vmem:[#allocation4 + $0x10] sm:$0xff]
    %v281 = vld [vmem:[#allocation4 + $0x18] sm:$0xff]
    %v282 = vld [vmem:[#allocation4 + $0x20] sm:$0xff]
    %v283 = vld [vmem:[#allocation4 + $0x28] sm:$0xff]
    %v284 = vld [vmem:[#allocation4 + $0x30] sm:$0xff]
    %v285 = vld [vmem:[#allocation4 + $0x38] sm:$0xff]
    %v286 = vld [vmem:[#allocation9] sm:$0xff]
    %v287 = vld [vmem:[#allocation9 + $0x8] sm:$0x7f]
    %v288 = vld [vmem:[%s5] sm:$0x1]
    %v290 = vperm.slane %v288, 0
    %vm292 = vcmask 121856
    %v294 = vsel %vm292, %v278, 0
    %v297 = vsel %vm292, %v279, 0
    %v300 = vsel %vm292, %v280, 0
    %v303 = vsel %vm292, %v281, 0
    %v306 = vsel %vm292, %v282, 0
    %v309 = vsel %vm292, %v283, 0
    %v312 = vsel %vm292, %v284, 0
    %v315 = vsel %vm292, %v285, 0
    %v318 = vsel %vm109, %v287, 0
    %320 = vmatpush.msra.mxu0 0.0
    %321 = vmatpush.msra.mxu0 0.0
    %322 = vmatpush.msra.mxu0 0.0
    %323 = vmatpush.msra.mxu0 0.0
    %324 = vmatpush.msra.mxu0 0.0
    %325 = vmatpush.msra.mxu0 0.0
    %326 = vmatpush.msra.mxu0 0.0
    %327 = vmatpush.msra.mxu0 0.0
    %328 = vmatpush.msra.mxu0 0.0
    %329 = vmatpush.msra.mxu0 0.0
    %330 = vmatpush.msra.mxu0 0.0
    %331 = vmatpush.msra.mxu0 0.0
    %332 = vmatpush.msra.mxu0 0.0
    %333 = vmatpush.msra.mxu0 0.0
    %v334 = vand.u32 %v318, 4294901760
    %335 = vmatpush.msra.mxu0 %v334
    %v336 = vand.u32 %v286, 4294901760
    %337 = vmatpush.msra.mxu0 %v336
    %v338 = vand.u32 %v294, 4294901760
    %v339 = vsub.f32 %v294, %v338
    %v340 = vand.u32 %v339, 4294901760
    %v341 = vsub.f32 %v339, %v340
    %v342 = vand.u32 %v341, 4294901760
    %343 = vmatmul.f32.gmra.mxu0 %v342
    %v344 = vpop.f32.mrf.mxu0
    %v345 = vadd.f32 %v290, %v344
    %v346 = vand.u32 %v297, 4294901760
    %v347 = vsub.f32 %v297, %v346
    %v348 = vand.u32 %v347, 4294901760
    %v349 = vsub.f32 %v347, %v348
    %v350 = vand.u32 %v349, 4294901760
    %351 = vmatmul.f32.gmra.mxu0 %v350
    %v352 = vpop.f32.mrf.mxu0
    %v353 = vadd.f32 %v290, %v352
    %v354 = vand.u32 %v300, 4294901760
    %v355 = vsub.f32 %v300, %v354
    %v356 = vand.u32 %v355, 4294901760
    %v357 = vsub.f32 %v355, %v356
    %v358 = vand.u32 %v357, 4294901760
    %359 = vmatmul.f32.gmra.mxu0 %v358
    %v360 = vpop.f32.mrf.mxu0
    %v361 = vadd.f32 %v290, %v360
    %v362 = vand.u32 %v303, 4294901760
    %v363 = vsub.f32 %v303, %v362
    %v364 = vand.u32 %v363, 4294901760
    %v365 = vsub.f32 %v363, %v364
    %v366 = vand.u32 %v365, 4294901760
    %367 = vmatmul.f32.gmra.mxu0 %v366
    %v368 = vpop.f32.mrf.mxu0
    %v369 = vadd.f32 %v290, %v368
    %v370 = vand.u32 %v306, 4294901760
    %v371 = vsub.f32 %v306, %v370
    %v372 = vand.u32 %v371, 4294901760
    %v373 = vsub.f32 %v371, %v372
    %v374 = vand.u32 %v373, 4294901760
    %375 = vmatmul.f32.gmra.mxu0 %v374
    %v376 = vpop.f32.mrf.mxu0
    %v377 = vadd.f32 %v290, %v376
    %v378 = vand.u32 %v309, 4294901760
    %v379 = vsub.f32 %v309, %v378
    %v380 = vand.u32 %v379, 4294901760
    %v381 = vsub.f32 %v379, %v380
    %v382 = vand.u32 %v381, 4294901760
    %383 = vmatmul.f32.gmra.mxu0 %v382
    %v384 = vpop.f32.mrf.mxu0
    %v385 = vadd.f32 %v290, %v384
    %v386 = vand.u32 %v312, 4294901760
    %v387 = vsub.f32 %v312, %v386
    %v388 = vand.u32 %v387, 4294901760
    %v389 = vsub.f32 %v387, %v388
    %v390 = vand.u32 %v389, 4294901760
    %391 = vmatmul.f32.gmra.mxu0 %v390
    %v392 = vpop.f32.mrf.mxu0
    %v393 = vadd.f32 %v290, %v392
    %v394 = vand.u32 %v315, 4294901760
    %v395 = vsub.f32 %v315, %v394
    %v396 = vand.u32 %v395, 4294901760
    %v397 = vsub.f32 %v395, %v396
    %v398 = vand.u32 %v397, 4294901760
    %399 = vmatmul.f32.gmra.mxu0 %v398
    %v400 = vpop.f32.mrf.mxu0
    %v401 = vadd.f32 %v290, %v400
    %402 = vdwg.mxu0
    %403 = vmatpush.msra.mxu0 0.0
    %404 = vmatpush.msra.mxu0 0.0
    %405 = vmatpush.msra.mxu0 0.0
    %406 = vmatpush.msra.mxu0 0.0
    %407 = vmatpush.msra.mxu0 0.0
    %408 = vmatpush.msra.mxu0 0.0
    %409 = vmatpush.msra.mxu0 0.0
    %410 = vmatpush.msra.mxu0 0.0
    %411 = vmatpush.msra.mxu0 0.0
    %412 = vmatpush.msra.mxu0 0.0
    %413 = vmatpush.msra.mxu0 0.0
    %414 = vmatpush.msra.mxu0 0.0
    %415 = vmatpush.msra.mxu0 0.0
    %416 = vmatpush.msra.mxu0 0.0
    %v417 = vand.u32 %v318, 4294901760
    %v418 = vsub.f32 %v318, %v417
    %v419 = vand.u32 %v418, 4294901760
    %v420 = vsub.f32 %v418, %v419
    %v421 = vand.u32 %v420, 4294901760
    %422 = vmatpush.msra.mxu0 %v421
    %v423 = vand.u32 %v286, 4294901760
    %v424 = vsub.f32 %v286, %v423
    %v425 = vand.u32 %v424, 4294901760
    %v426 = vsub.f32 %v424, %v425
    %v427 = vand.u32 %v426, 4294901760
    %428 = vmatpush.msra.mxu0 %v427
    %v429 = vand.u32 %v294, 4294901760
    %430 = vmatmul.f32.gmra.mxu0 %v429
    %v431 = vpop.f32.mrf.mxu0
    %v432 = vadd.f32 %v345, %v431
    %v433 = vand.u32 %v297, 4294901760
    %434 = vmatmul.f32.gmra.mxu0 %v433
    %v435 = vpop.f32.mrf.mxu0
    %v436 = vadd.f32 %v353, %v435
    %v437 = vand.u32 %v300, 4294901760
    %438 = vmatmul.f32.gmra.mxu0 %v437
    %v439 = vpop.f32.mrf.mxu0
    %v440 = vadd.f32 %v361, %v439
    %v441 = vand.u32 %v303, 4294901760
    %442 = vmatmul.f32.gmra.mxu0 %v441
    %v443 = vpop.f32.mrf.mxu0
    %v444 = vadd.f32 %v369, %v443
    %v445 = vand.u32 %v306, 4294901760
    %446 = vmatmul.f32.gmra.mxu0 %v445
    %v447 = vpop.f32.mrf.mxu0
    %v448 = vadd.f32 %v377, %v447
    %v449 = vand.u32 %v309, 4294901760
    %450 = vmatmul.f32.gmra.mxu0 %v449
    %v451 = vpop.f32.mrf.mxu0
    %v452 = vadd.f32 %v385, %v451
    %v453 = vand.u32 %v312, 4294901760
    %454 = vmatmul.f32.gmra.mxu0 %v453
    %v455 = vpop.f32.mrf.mxu0
    %v456 = vadd.f32 %v393, %v455
    %v457 = vand.u32 %v315, 4294901760
    %458 = vmatmul.f32.gmra.mxu0 %v457
    %v459 = vpop.f32.mrf.mxu0
    %v460 = vadd.f32 %v401, %v459
    %461 = vdwg.mxu0
    %462 = vmatpush.msra.mxu0 0.0
    %463 = vmatpush.msra.mxu0 0.0
    %464 = vmatpush.msra.mxu0 0.0
    %465 = vmatpush.msra.mxu0 0.0
    %466 = vmatpush.msra.mxu0 0.0
    %467 = vmatpush.msra.mxu0 0.0
    %468 = vmatpush.msra.mxu0 0.0
    %469 = vmatpush.msra.mxu0 0.0
    %470 = vmatpush.msra.mxu0 0.0
    %471 = vmatpush.msra.mxu0 0.0
    %472 = vmatpush.msra.mxu0 0.0
    %473 = vmatpush.msra.mxu0 0.0
    %474 = vmatpush.msra.mxu0 0.0
    %475 = vmatpush.msra.mxu0 0.0
    %v476 = vand.u32 %v318, 4294901760
    %v477 = vsub.f32 %v318, %v476
    %478 = vmatpush.msra.mxu0 %v477
    %v479 = vand.u32 %v286, 4294901760
    %v480 = vsub.f32 %v286, %v479
    %481 = vmatpush.msra.mxu0 %v480
    %v482 = vand.u32 %v294, 4294901760
    %v483 = vsub.f32 %v294, %v482
    %484 = vmatmul.f32.gmra.mxu0 %v483
    %v485 = vpop.f32.mrf.mxu0
    %v486 = vadd.f32 %v432, %v485
    %v487 = vand.u32 %v297, 4294901760
    %v488 = vsub.f32 %v297, %v487
    %489 = vmatmul.f32.gmra.mxu0 %v488
    %v490 = vpop.f32.mrf.mxu0
    %v491 = vadd.f32 %v436, %v490
    %v492 = vand.u32 %v300, 4294901760
    %v493 = vsub.f32 %v300, %v492
    %494 = vmatmul.f32.gmra.mxu0 %v493
    %v495 = vpop.f32.mrf.mxu0
    %v496 = vadd.f32 %v440, %v495
    %v497 = vand.u32 %v303, 4294901760
    %v498 = vsub.f32 %v303, %v497
    %499 = vmatmul.f32.gmra.mxu0 %v498
    %v500 = vpop.f32.mrf.mxu0
    %v501 = vadd.f32 %v444, %v500
    %v502 = vand.u32 %v306, 4294901760
    %v503 = vsub.f32 %v306, %v502
    %504 = vmatmul.f32.gmra.mxu0 %v503
    %v505 = vpop.f32.mrf.mxu0
    %v506 = vadd.f32 %v448, %v505
    %v507 = vand.u32 %v309, 4294901760
    %v508 = vsub.f32 %v309, %v507
    %509 = vmatmul.f32.gmra.mxu0 %v508
    %v510 = vpop.f32.mrf.mxu0
    %v511 = vadd.f32 %v452, %v510
    %v512 = vand.u32 %v312, 4294901760
    %v513 = vsub.f32 %v312, %v512
    %514 = vmatmul.f32.gmra.mxu0 %v513
    %v515 = vpop.f32.mrf.mxu0
    %v516 = vadd.f32 %v456, %v515
    %v517 = vand.u32 %v315, 4294901760
    %v518 = vsub.f32 %v315, %v517
    %519 = vmatmul.f32.gmra.mxu0 %v518
    %v520 = vpop.f32.mrf.mxu0
    %v521 = vadd.f32 %v460, %v520
    %522 = vdwg.mxu0
    %523 = vmatpush.msra.mxu0 0.0
    %524 = vmatpush.msra.mxu0 0.0
    %525 = vmatpush.msra.mxu0 0.0
    %526 = vmatpush.msra.mxu0 0.0
    %527 = vmatpush.msra.mxu0 0.0
    %528 = vmatpush.msra.mxu0 0.0
    %529 = vmatpush.msra.mxu0 0.0
    %530 = vmatpush.msra.mxu0 0.0
    %531 = vmatpush.msra.mxu0 0.0
    %532 = vmatpush.msra.mxu0 0.0
    %533 = vmatpush.msra.mxu0 0.0
    %534 = vmatpush.msra.mxu0 0.0
    %535 = vmatpush.msra.mxu0 0.0
    %536 = vmatpush.msra.mxu0 0.0
    %v537 = vand.u32 %v318, 4294901760
    %538 = vmatpush.msra.mxu0 %v537
    %v539 = vand.u32 %v286, 4294901760
    %540 = vmatpush.msra.mxu0 %v539
    %v541 = vand.u32 %v294, 4294901760
    %v542 = vsub.f32 %v294, %v541
    %v543 = vand.u32 %v542, 4294901760
    %544 = vmatmul.f32.gmra.mxu0 %v543
    %v545 = vpop.f32.mrf.mxu0
    %v546 = vadd.f32 %v486, %v545
    %v547 = vand.u32 %v297, 4294901760
    %v548 = vsub.f32 %v297, %v547
    %v549 = vand.u32 %v548, 4294901760
    %550 = vmatmul.f32.gmra.mxu0 %v549
    %v551 = vpop.f32.mrf.mxu0
    %v552 = vadd.f32 %v491, %v551
    %v553 = vand.u32 %v300, 4294901760
    %v554 = vsub.f32 %v300, %v553
    %v555 = vand.u32 %v554, 4294901760
    %556 = vmatmul.f32.gmra.mxu0 %v555
    %v557 = vpop.f32.mrf.mxu0
    %v558 = vadd.f32 %v496, %v557
    %v559 = vand.u32 %v303, 4294901760
    %v560 = vsub.f32 %v303, %v559
    %v561 = vand.u32 %v560, 4294901760
    %562 = vmatmul.f32.gmra.mxu0 %v561
    %v563 = vpop.f32.mrf.mxu0
    %v564 = vadd.f32 %v501, %v563
    %v565 = vand.u32 %v306, 4294901760
    %v566 = vsub.f32 %v306, %v565
    %v567 = vand.u32 %v566, 4294901760
    %568 = vmatmul.f32.gmra.mxu0 %v567
    %v569 = vpop.f32.mrf.mxu0
    %v570 = vadd.f32 %v506, %v569
    %v571 = vand.u32 %v309, 4294901760
    %v572 = vsub.f32 %v309, %v571
    %v573 = vand.u32 %v572, 4294901760
    %574 = vmatmul.f32.gmra.mxu0 %v573
    %v575 = vpop.f32.mrf.mxu0
    %v576 = vadd.f32 %v511, %v575
    %v577 = vand.u32 %v312, 4294901760
    %v578 = vsub.f32 %v312, %v577
    %v579 = vand.u32 %v578, 4294901760
    %580 = vmatmul.f32.gmra.mxu0 %v579
    %v581 = vpop.f32.mrf.mxu0
    %v582 = vadd.f32 %v516, %v581
    %v583 = vand.u32 %v315, 4294901760
    %v584 = vsub.f32 %v315, %v583
    %v585 = vand.u32 %v584, 4294901760
    %586 = vmatmul.f32.gmra.mxu0 %v585
    %v587 = vpop.f32.mrf.mxu0
    %v588 = vadd.f32 %v521, %v587
    %589 = vdwg.mxu0
    %590 = vmatpush.msra.mxu0 0.0
    %591 = vmatpush.msra.mxu0 0.0
    %592 = vmatpush.msra.mxu0 0.0
    %593 = vmatpush.msra.mxu0 0.0
    %594 = vmatpush.msra.mxu0 0.0
    %595 = vmatpush.msra.mxu0 0.0
    %596 = vmatpush.msra.mxu0 0.0
    %597 = vmatpush.msra.mxu0 0.0
    %598 = vmatpush.msra.mxu0 0.0
    %599 = vmatpush.msra.mxu0 0.0
    %600 = vmatpush.msra.mxu0 0.0
    %601 = vmatpush.msra.mxu0 0.0
    %602 = vmatpush.msra.mxu0 0.0
    %603 = vmatpush.msra.mxu0 0.0
    %v604 = vand.u32 %v318, 4294901760
    %v605 = vsub.f32 %v318, %v604
    %v606 = vand.u32 %v605, 4294901760
    %607 = vmatpush.msra.mxu0 %v606
    %v608 = vand.u32 %v286, 4294901760
    %v609 = vsub.f32 %v286, %v608
    %v610 = vand.u32 %v609, 4294901760
    %611 = vmatpush.msra.mxu0 %v610
    %v612 = vand.u32 %v294, 4294901760
    %613 = vmatmul.f32.gmra.mxu0 %v612
    %v614 = vpop.f32.mrf.mxu0
    %v615 = vadd.f32 %v546, %v614
    %v616 = vand.u32 %v297, 4294901760
    %617 = vmatmul.f32.gmra.mxu0 %v616
    %v618 = vpop.f32.mrf.mxu0
    %v619 = vadd.f32 %v552, %v618
    %v620 = vand.u32 %v300, 4294901760
    %621 = vmatmul.f32.gmra.mxu0 %v620
    %v622 = vpop.f32.mrf.mxu0
    %v623 = vadd.f32 %v558, %v622
    %v624 = vand.u32 %v303, 4294901760
    %625 = vmatmul.f32.gmra.mxu0 %v624
    %v626 = vpop.f32.mrf.mxu0
    %v627 = vadd.f32 %v564, %v626
    %v628 = vand.u32 %v306, 4294901760
    %629 = vmatmul.f32.gmra.mxu0 %v628
    %v630 = vpop.f32.mrf.mxu0
    %v631 = vadd.f32 %v570, %v630
    %v632 = vand.u32 %v309, 4294901760
    %633 = vmatmul.f32.gmra.mxu0 %v632
    %v634 = vpop.f32.mrf.mxu0
    %v635 = vadd.f32 %v576, %v634
    %v636 = vand.u32 %v312, 4294901760
    %637 = vmatmul.f32.gmra.mxu0 %v636
    %v638 = vpop.f32.mrf.mxu0
    %v639 = vadd.f32 %v582, %v638
    %v640 = vand.u32 %v315, 4294901760
    %641 = vmatmul.f32.gmra.mxu0 %v640
    %v642 = vpop.f32.mrf.mxu0
    %v643 = vadd.f32 %v588, %v642
    %644 = vdwg.mxu0
    %645 = vmatpush.msra.mxu0 0.0
    %646 = vmatpush.msra.mxu0 0.0
    %647 = vmatpush.msra.mxu0 0.0
    %648 = vmatpush.msra.mxu0 0.0
    %649 = vmatpush.msra.mxu0 0.0
    %650 = vmatpush.msra.mxu0 0.0
    %651 = vmatpush.msra.mxu0 0.0
    %652 = vmatpush.msra.mxu0 0.0
    %653 = vmatpush.msra.mxu0 0.0
    %654 = vmatpush.msra.mxu0 0.0
    %655 = vmatpush.msra.mxu0 0.0
    %656 = vmatpush.msra.mxu0 0.0
    %657 = vmatpush.msra.mxu0 0.0
    %658 = vmatpush.msra.mxu0 0.0
    %v659 = vand.u32 %v318, 4294901760
    %660 = vmatpush.msra.mxu0 %v659
    %v661 = vand.u32 %v286, 4294901760
    %662 = vmatpush.msra.mxu0 %v661
    %v663 = vand.u32 %v294, 4294901760
    %664 = vmatmul.f32.gmra.mxu0 %v663
    %v665 = vpop.f32.mrf.mxu0
    %v666 = vadd.f32 %v615, %v665
    %v667 = vand.u32 %v297, 4294901760
    %668 = vmatmul.f32.gmra.mxu0 %v667
    %v669 = vpop.f32.mrf.mxu0
    %v670 = vadd.f32 %v619, %v669
    %v671 = vand.u32 %v300, 4294901760
    %672 = vmatmul.f32.gmra.mxu0 %v671
    %v673 = vpop.f32.mrf.mxu0
    %v674 = vadd.f32 %v623, %v673
    %v675 = vand.u32 %v303, 4294901760
    %676 = vmatmul.f32.gmra.mxu0 %v675
    %v677 = vpop.f32.mrf.mxu0
    %v678 = vadd.f32 %v627, %v677
    %v679 = vand.u32 %v306, 4294901760
    %680 = vmatmul.f32.gmra.mxu0 %v679
    %v681 = vpop.f32.mrf.mxu0
    %v682 = vadd.f32 %v631, %v681
    %v683 = vand.u32 %v309, 4294901760
    %684 = vmatmul.f32.gmra.mxu0 %v683
    %v685 = vpop.f32.mrf.mxu0
    %v686 = vadd.f32 %v635, %v685
    %v687 = vand.u32 %v312, 4294901760
    %688 = vmatmul.f32.gmra.mxu0 %v687
    %v689 = vpop.f32.mrf.mxu0
    %v690 = vadd.f32 %v639, %v689
    %v691 = vand.u32 %v315, 4294901760
    %692 = vmatmul.f32.gmra.mxu0 %v691
    %v693 = vpop.f32.mrf.mxu0
    %v694 = vadd.f32 %v643, %v693
    %695 = vdwg.mxu0
    %vm696 = vcmask 785408
    %697 = vst.msk [vmem:[#allocation2] sm:$0xff] %vm696, %v666
    %698 = vst.msk [vmem:[#allocation2 + $0x8] sm:$0xff] %vm696, %v670
    %699 = vst.msk [vmem:[#allocation2 + $0x10] sm:$0xff] %vm696, %v674
    %700 = vst.msk [vmem:[#allocation2 + $0x18] sm:$0xff] %vm696, %v678
    %701 = vst.msk [vmem:[#allocation2 + $0x20] sm:$0xff] %vm696, %v682
    %702 = vst.msk [vmem:[#allocation2 + $0x28] sm:$0xff] %vm696, %v686
    %703 = vst.msk [vmem:[#allocation2 + $0x30] sm:$0xff] %vm696, %v690
    %704 = vst.msk [vmem:[#allocation2 + $0x38] sm:$0xff] %vm696, %v694
    %v705 = vld [vmem:[#allocation10] sm:$0xff]
    %v706 = vld [vmem:[#allocation10 + $0x8] sm:$0xff]
    %v707 = vld [vmem:[#allocation10 + $0x10] sm:$0xff]
    %v708 = vld [vmem:[#allocation10 + $0x18] sm:$0xff]
    %v709 = vld [vmem:[%s7] sm:$0x1]
    %v710 = vld [vmem:[#allocation2] ss:$8 sm:$0xf]
    %v711 = vld [vmem:[#allocation2] ss:$8 sm:$0xf0]
    %v712 = vor.u32 %v710, %v711
    %vm713 = vcmask 261120
    %v715 = vsel %vm713, 0.0, 0
    %717 = vmatpush.msra.mxu0 0.0
    %718 = vmatpush.msra.mxu0 0.0
    %719 = vmatpush.msra.mxu0 0.0
    %720 = vmatpush.msra.mxu0 0.0
    %721 = vmatpush.msra.mxu0 0.0
    %722 = vmatpush.msra.mxu0 0.0
    %723 = vmatpush.msra.mxu0 0.0
    %724 = vmatpush.msra.mxu0 0.0
    %725 = vmatpush.msra.mxu0 0.0
    %726 = vmatpush.msra.mxu0 0.0
    %727 = vmatpush.msra.mxu0 0.0
    %728 = vmatpush.msra.mxu0 0.0
    %v729 = vand.u32 %v708, 4294901760
    %730 = vmatpush.msra.mxu0 %v729
    %v731 = vand.u32 %v707, 4294901760
    %732 = vmatpush.msra.mxu0 %v731
    %v733 = vand.u32 %v706, 4294901760
    %734 = vmatpush.msra.mxu0 %v733
    %v735 = vand.u32 %v705, 4294901760
    %736 = vmatpush.msra.mxu0 %v735
    %v737 = vand.u32 %v715, 4294901760
    %v738 = vsub.f32 %v715, %v737
    %v739 = vand.u32 %v738, 4294901760
    %v740 = vsub.f32 %v738, %v739
    %v741 = vand.u32 %v740, 4294901760
    %742 = vmatmul.f32.gmra.mxu0 %v741
    %v743 = vpop.f32.mrf.mxu0
    %v744 = vadd.f32 0.0, %v743
    %745 = vdwg.mxu0
    %746 = vmatpush.msra.mxu0 0.0
    %747 = vmatpush.msra.mxu0 0.0
    %748 = vmatpush.msra.mxu0 0.0
    %749 = vmatpush.msra.mxu0 0.0
    %750 = vmatpush.msra.mxu0 0.0
    %751 = vmatpush.msra.mxu0 0.0
    %752 = vmatpush.msra.mxu0 0.0
    %753 = vmatpush.msra.mxu0 0.0
    %754 = vmatpush.msra.mxu0 0.0
    %755 = vmatpush.msra.mxu0 0.0
    %756 = vmatpush.msra.mxu0 0.0
    %757 = vmatpush.msra.mxu0 0.0
    %v758 = vand.u32 %v708, 4294901760
    %v759 = vsub.f32 %v708, %v758
    %v760 = vand.u32 %v759, 4294901760
    %v761 = vsub.f32 %v759, %v760
    %v762 = vand.u32 %v761, 4294901760
    %763 = vmatpush.msra.mxu0 %v762
    %v764 = vand.u32 %v707, 4294901760
    %v765 = vsub.f32 %v707, %v764
    %v766 = vand.u32 %v765, 4294901760
    %v767 = vsub.f32 %v765, %v766
    %v768 = vand.u32 %v767, 4294901760
    %769 = vmatpush.msra.mxu0 %v768
    %v770 = vand.u32 %v706, 4294901760
    %v771 = vsub.f32 %v706, %v770
    %v772 = vand.u32 %v771, 4294901760
    %v773 = vsub.f32 %v771, %v772
    %v774 = vand.u32 %v773, 4294901760
    %775 = vmatpush.msra.mxu0 %v774
    %v776 = vand.u32 %v705, 4294901760
    %v777 = vsub.f32 %v705, %v776
    %v778 = vand.u32 %v777, 4294901760
    %v779 = vsub.f32 %v777, %v778
    %v780 = vand.u32 %v779, 4294901760
    %781 = vmatpush.msra.mxu0 %v780
    %v782 = vand.u32 %v715, 4294901760
    %783 = vmatmul.f32.gmra.mxu0 %v782
    %v784 = vpop.f32.mrf.mxu0
    %v785 = vadd.f32 %v744, %v784
    %786 = vdwg.mxu0
    %787 = vmatpush.msra.mxu0 0.0
    %788 = vmatpush.msra.mxu0 0.0
    %789 = vmatpush.msra.mxu0 0.0
    %790 = vmatpush.msra.mxu0 0.0
    %791 = vmatpush.msra.mxu0 0.0
    %792 = vmatpush.msra.mxu0 0.0
    %793 = vmatpush.msra.mxu0 0.0
    %794 = vmatpush.msra.mxu0 0.0
    %795 = vmatpush.msra.mxu0 0.0
    %796 = vmatpush.msra.mxu0 0.0
    %797 = vmatpush.msra.mxu0 0.0
    %798 = vmatpush.msra.mxu0 0.0
    %v799 = vand.u32 %v708, 4294901760
    %v800 = vsub.f32 %v708, %v799
    %801 = vmatpush.msra.mxu0 %v800
    %v802 = vand.u32 %v707, 4294901760
    %v803 = vsub.f32 %v707, %v802
    %804 = vmatpush.msra.mxu0 %v803
    %v805 = vand.u32 %v706, 4294901760
    %v806 = vsub.f32 %v706, %v805
    %807 = vmatpush.msra.mxu0 %v806
    %v808 = vand.u32 %v705, 4294901760
    %v809 = vsub.f32 %v705, %v808
    %810 = vmatpush.msra.mxu0 %v809
    %v811 = vand.u32 %v715, 4294901760
    %v812 = vsub.f32 %v715, %v811
    %813 = vmatmul.f32.gmra.mxu0 %v812
    %v814 = vpop.f32.mrf.mxu0
    %v815 = vadd.f32 %v785, %v814
    %816 = vdwg.mxu0
    %817 = vmatpush.msra.mxu0 0.0
    %818 = vmatpush.msra.mxu0 0.0
    %819 = vmatpush.msra.mxu0 0.0
    %820 = vmatpush.msra.mxu0 0.0
    %821 = vmatpush.msra.mxu0 0.0
    %822 = vmatpush.msra.mxu0 0.0
    %823 = vmatpush.msra.mxu0 0.0
    %824 = vmatpush.msra.mxu0 0.0
    %825 = vmatpush.msra.mxu0 0.0
    %826 = vmatpush.msra.mxu0 0.0
    %827 = vmatpush.msra.mxu0 0.0
    %828 = vmatpush.msra.mxu0 0.0
    %v829 = vand.u32 %v708, 4294901760
    %830 = vmatpush.msra.mxu0 %v829
    %v831 = vand.u32 %v707, 4294901760
    %832 = vmatpush.msra.mxu0 %v831
    %v833 = vand.u32 %v706, 4294901760
    %834 = vmatpush.msra.mxu0 %v833
    %v835 = vand.u32 %v705, 4294901760
    %836 = vmatpush.msra.mxu0 %v835
    %v837 = vand.u32 %v715, 4294901760
    %v838 = vsub.f32 %v715, %v837
    %v839 = vand.u32 %v838, 4294901760
    %840 = vmatmul.f32.gmra.mxu0 %v839
    %v841 = vpop.f32.mrf.mxu0
    %v842 = vadd.f32 %v815, %v841
    %843 = vdwg.mxu0
    %844 = vmatpush.msra.mxu0 0.0
    %845 = vmatpush.msra.mxu0 0.0
    %846 = vmatpush.msra.mxu0 0.0
    %847 = vmatpush.msra.mxu0 0.0
    %848 = vmatpush.msra.mxu0 0.0
    %849 = vmatpush.msra.mxu0 0.0
    %850 = vmatpush.msra.mxu0 0.0
    %851 = vmatpush.msra.mxu0 0.0
    %852 = vmatpush.msra.mxu0 0.0
    %853 = vmatpush.msra.mxu0 0.0
    %854 = vmatpush.msra.mxu0 0.0
    %855 = vmatpush.msra.mxu0 0.0
    %v856 = vand.u32 %v708, 4294901760
    %v857 = vsub.f32 %v708, %v856
    %v858 = vand.u32 %v857, 4294901760
    %859 = vmatpush.msra.mxu0 %v858
    %v860 = vand.u32 %v707, 4294901760
    %v861 = vsub.f32 %v707, %v860
    %v862 = vand.u32 %v861, 4294901760
    %863 = vmatpush.msra.mxu0 %v862
    %v864 = vand.u32 %v706, 4294901760
    %v865 = vsub.f32 %v706, %v864
    %v866 = vand.u32 %v865, 4294901760
    %867 = vmatpush.msra.mxu0 %v866
    %v868 = vand.u32 %v705, 4294901760
    %v869 = vsub.f32 %v705, %v868
    %v870 = vand.u32 %v869, 4294901760
    %871 = vmatpush.msra.mxu0 %v870
    %v872 = vand.u32 %v715, 4294901760
    %873 = vmatmul.f32.gmra.mxu0 %v872
    %v874 = vpop.f32.mrf.mxu0
    %v875 = vadd.f32 %v842, %v874
    %876 = vdwg.mxu0
    %877 = vmatpush.msra.mxu0 0.0
    %878 = vmatpush.msra.mxu0 0.0
    %879 = vmatpush.msra.mxu0 0.0
    %880 = vmatpush.msra.mxu0 0.0
    %881 = vmatpush.msra.mxu0 0.0
    %882 = vmatpush.msra.mxu0 0.0
    %883 = vmatpush.msra.mxu0 0.0
    %884 = vmatpush.msra.mxu0 0.0
    %885 = vmatpush.msra.mxu0 0.0
    %886 = vmatpush.msra.mxu0 0.0
    %887 = vmatpush.msra.mxu0 0.0
    %888 = vmatpush.msra.mxu0 0.0
    %v889 = vand.u32 %v708, 4294901760
    %890 = vmatpush.msra.mxu0 %v889
    %v891 = vand.u32 %v707, 4294901760
    %892 = vmatpush.msra.mxu0 %v891
    %v893 = vand.u32 %v706, 4294901760
    %894 = vmatpush.msra.mxu0 %v893
    %v895 = vand.u32 %v705, 4294901760
    %896 = vmatpush.msra.mxu0 %v895
    %v897 = vand.u32 %v715, 4294901760
    %898 = vmatmul.f32.gmra.mxu0 %v897
    %v899 = vpop.f32.mrf.mxu0
    %v900 = vadd.f32 %v875, %v899
    %901 = vdwg.mxu0
    %v902 = vadd.f32 %v712, %v900
    %v903 = vxor.u32 %v902, 2147483648
    %v904 = vmul.f32 %v903, 1.442695
    %v905 = vpow.pop %v904
    %v906 = vadd.f32 %v905, 1.0
    %v907 = vrcp.pop %v906
    %v908 = vmul.f32 %v906, %v907
    %v909 = vsub.f32 1.0, %v908
    %v910 = vmul.f32 %v907, %v909
    %v911 = vadd.f32 %v907, %v910
    %vm912 = vweird.f32 %v906
    %vm913 = vweird.f32 %v907
    %vm914 = vmor %vm912, %vm913
    %v915 = vsel %vm914, %v907, %v911
    %v916 = vand.u32 2147483647, %v906
    %vm917 = vcmp.eq.f32.partialorder %v916, 8.507059e+37
    %v918 = vand.u32 %v906, 2147483648
    %v919 = vor.u32 1.1754944e-38, %v918
    %v920 = vsel %vm917, %v919, %v915
    %v921 = vmul.f32 1.0, %v920
    %v922 = vmul.f32 %v921, 0.0
    %v923 = vtanh.pop %v902
    %925 = vrot.lane.b32.xlu0 %v923, 64
    %v926 = vpop.permute.xlu0 %925
    %v928 = vmul.f32 %v277, %v926
    %v929 = vadd.f32 %v922, %v928
    %v930 = vtanh.pop %v929
    %932 = vrot.lane.b32.xlu0 %v930, 32
    %v933 = vpop.permute.xlu0 %932
    %v935 = vmul.f32 %v921, %v933
    %v937 = vperm.slane %v709, 0
    %938 = vrot.lane.b32.xlu0 %v937, 32
    %v939 = vpop.permute.xlu0 %938
    %v941 = vmul.f32 %v935, %v939
    %943 = vrot.lane.b32.xlu0 %v941, 96
    %v944 = vpop.permute.xlu0 %943
    %v946 = vsel %vm713, %v944, 0.0
    %947 = vadd.xlane.f32.xlu0 %v946
    %v948 = vpop.xlane.xlu0 %947
    %s949 = scalar_lea.vmem [#allocation2], 1
    %v950 = vld [vmem:[%s949] ss:$8 sm:$0xf]
    %v951 = vld [vmem:[%s949] ss:$8 sm:$0xf0]
    %v952 = vor.u32 %v950, %v951
    %954 = vrot.lane.b32.xlu0 %v935, 96
    %v955 = vpop.permute.xlu0 %954
    %v956 = vsel %vm713, %v955, 0
    %958 = vmatpush.msra.mxu0 0.0
    %959 = vmatpush.msra.mxu0 0.0
    %960 = vmatpush.msra.mxu0 0.0
    %961 = vmatpush.msra.mxu0 0.0
    %962 = vmatpush.msra.mxu0 0.0
    %963 = vmatpush.msra.mxu0 0.0
    %964 = vmatpush.msra.mxu0 0.0
    %965 = vmatpush.msra.mxu0 0.0
    %966 = vmatpush.msra.mxu0 0.0
    %967 = vmatpush.msra.mxu0 0.0
    %968 = vmatpush.msra.mxu0 0.0
    %969 = vmatpush.msra.mxu0 0.0
    %v970 = vand.u32 %v708, 4294901760
    %971 = vmatpush.msra.mxu0 %v970
    %v972 = vand.u32 %v707, 4294901760
    %973 = vmatpush.msra.mxu0 %v972
    %v974 = vand.u32 %v706, 4294901760
    %975 = vmatpush.msra.mxu0 %v974
    %v976 = vand.u32 %v705, 4294901760
    %977 = vmatpush.msra.mxu0 %v976
    %v978 = vand.u32 %v956, 4294901760
    %v979 = vsub.f32 %v956, %v978
    %v980 = vand.u32 %v979, 4294901760
    %v981 = vsub.f32 %v979, %v980
    %v982 = vand.u32 %v981, 4294901760
    %983 = vmatmul.f32.gmra.mxu0 %v982
    %v984 = vpop.f32.mrf.mxu0
    %v985 = vadd.f32 0.0, %v984
    %986 = vdwg.mxu0
    %987 = vmatpush.msra.mxu0 0.0
    %988 = vmatpush.msra.mxu0 0.0
    %989 = vmatpush.msra.mxu0 0.0
    %990 = vmatpush.msra.mxu0 0.0
    %991 = vmatpush.msra.mxu0 0.0
    %992 = vmatpush.msra.mxu0 0.0
    %993 = vmatpush.msra.mxu0 0.0
    %994 = vmatpush.msra.mxu0 0.0
    %995 = vmatpush.msra.mxu0 0.0
    %996 = vmatpush.msra.mxu0 0.0
    %997 = vmatpush.msra.mxu0 0.0
    %998 = vmatpush.msra.mxu0 0.0
    %v999 = vand.u32 %v708, 4294901760
    %v1000 = vsub.f32 %v708, %v999
    %v1001 = vand.u32 %v1000, 4294901760
    %v1002 = vsub.f32 %v1000, %v1001
    %v1003 = vand.u32 %v1002, 4294901760
    %1004 = vmatpush.msra.mxu0 %v1003
    %v1005 = vand.u32 %v707, 4294901760
    %v1006 = vsub.f32 %v707, %v1005
    %v1007 = vand.u32 %v1006, 4294901760
    %v1008 = vsub.f32 %v1006, %v1007
    %v1009 = vand.u32 %v1008, 4294901760
    %1010 = vmatpush.msra.mxu0 %v1009
    %v1011 = vand.u32 %v706, 4294901760
    %v1012 = vsub.f32 %v706, %v1011
    %v1013 = vand.u32 %v1012, 4294901760
    %v1014 = vsub.f32 %v1012, %v1013
    %v1015 = vand.u32 %v1014, 4294901760
    %1016 = vmatpush.msra.mxu0 %v1015
    %v1017 = vand.u32 %v705, 4294901760
    %v1018 = vsub.f32 %v705, %v1017
    %v1019 = vand.u32 %v1018, 4294901760
    %v1020 = vsub.f32 %v1018, %v1019
    %v1021 = vand.u32 %v1020, 4294901760
    %1022 = vmatpush.msra.mxu0 %v1021
    %v1023 = vand.u32 %v956, 4294901760
    %1024 = vmatmul.f32.gmra.mxu0 %v1023
    %v1025 = vpop.f32.mrf.mxu0
    %v1026 = vadd.f32 %v985, %v1025
    %1027 = vdwg.mxu0
    %1028 = vmatpush.msra.mxu0 0.0
    %1029 = vmatpush.msra.mxu0 0.0
    %1030 = vmatpush.msra.mxu0 0.0
    %1031 = vmatpush.msra.mxu0 0.0
    %1032 = vmatpush.msra.mxu0 0.0
    %1033 = vmatpush.msra.mxu0 0.0
    %1034 = vmatpush.msra.mxu0 0.0
    %1035 = vmatpush.msra.mxu0 0.0
    %1036 = vmatpush.msra.mxu0 0.0
    %1037 = vmatpush.msra.mxu0 0.0
    %1038 = vmatpush.msra.mxu0 0.0
    %1039 = vmatpush.msra.mxu0 0.0
    %v1040 = vand.u32 %v708, 4294901760
    %v1041 = vsub.f32 %v708, %v1040
    %1042 = vmatpush.msra.mxu0 %v1041
    %v1043 = vand.u32 %v707, 4294901760
    %v1044 = vsub.f32 %v707, %v1043
    %1045 = vmatpush.msra.mxu0 %v1044
    %v1046 = vand.u32 %v706, 4294901760
    %v1047 = vsub.f32 %v706, %v1046
    %1048 = vmatpush.msra.mxu0 %v1047
    %v1049 = vand.u32 %v705, 4294901760
    %v1050 = vsub.f32 %v705, %v1049
    %1051 = vmatpush.msra.mxu0 %v1050
    %v1052 = vand.u32 %v956, 4294901760
    %v1053 = vsub.f32 %v956, %v1052
    %1054 = vmatmul.f32.gmra.mxu0 %v1053
    %v1055 = vpop.f32.mrf.mxu0
    %v1056 = vadd.f32 %v1026, %v1055
    %1057 = vdwg.mxu0
    %1058 = vmatpush.msra.mxu0 0.0
    %1059 = vmatpush.msra.mxu0 0.0
    %1060 = vmatpush.msra.mxu0 0.0
    %1061 = vmatpush.msra.mxu0 0.0
    %1062 = vmatpush.msra.mxu0 0.0
    %1063 = vmatpush.msra.mxu0 0.0
    %1064 = vmatpush.msra.mxu0 0.0
    %1065 = vmatpush.msra.mxu0 0.0
    %1066 = vmatpush.msra.mxu0 0.0
    %1067 = vmatpush.msra.mxu0 0.0
    %1068 = vmatpush.msra.mxu0 0.0
    %1069 = vmatpush.msra.mxu0 0.0
    %v1070 = vand.u32 %v708, 4294901760
    %1071 = vmatpush.msra.mxu0 %v1070
    %v1072 = vand.u32 %v707, 4294901760
    %1073 = vmatpush.msra.mxu0 %v1072
    %v1074 = vand.u32 %v706, 4294901760
    %1075 = vmatpush.msra.mxu0 %v1074
    %v1076 = vand.u32 %v705, 4294901760
    %1077 = vmatpush.msra.mxu0 %v1076
    %v1078 = vand.u32 %v956, 4294901760
    %v1079 = vsub.f32 %v956, %v1078
    %v1080 = vand.u32 %v1079, 4294901760
    %1081 = vmatmul.f32.gmra.mxu0 %v1080
    %v1082 = vpop.f32.mrf.mxu0
    %v1083 = vadd.f32 %v1056, %v1082
    %1084 = vdwg.mxu0
    %1085 = vmatpush.msra.mxu0 0.0
    %1086 = vmatpush.msra.mxu0 0.0
    %1087 = vmatpush.msra.mxu0 0.0
    %1088 = vmatpush.msra.mxu0 0.0
    %1089 = vmatpush.msra.mxu0 0.0
    %1090 = vmatpush.msra.mxu0 0.0
    %1091 = vmatpush.msra.mxu0 0.0
    %1092 = vmatpush.msra.mxu0 0.0
    %1093 = vmatpush.msra.mxu0 0.0
    %1094 = vmatpush.msra.mxu0 0.0
    %1095 = vmatpush.msra.mxu0 0.0
    %1096 = vmatpush.msra.mxu0 0.0
    %v1097 = vand.u32 %v708, 4294901760
    %v1098 = vsub.f32 %v708, %v1097
    %v1099 = vand.u32 %v1098, 4294901760
    %1100 = vmatpush.msra.mxu0 %v1099
    %v1101 = vand.u32 %v707, 4294901760
    %v1102 = vsub.f32 %v707, %v1101
    %v1103 = vand.u32 %v1102, 4294901760
    %1104 = vmatpush.msra.mxu0 %v1103
    %v1105 = vand.u32 %v706, 4294901760
    %v1106 = vsub.f32 %v706, %v1105
    %v1107 = vand.u32 %v1106, 4294901760
    %1108 = vmatpush.msra.mxu0 %v1107
    %v1109 = vand.u32 %v705, 4294901760
    %v1110 = vsub.f32 %v705, %v1109
    %v1111 = vand.u32 %v1110, 4294901760
    %1112 = vmatpush.msra.mxu0 %v1111
    %v1113 = vand.u32 %v956, 4294901760
    %1114 = vmatmul.f32.gmra.mxu0 %v1113
    %v1115 = vpop.f32.mrf.mxu0
    %v1116 = vadd.f32 %v1083, %v1115
    %1117 = vdwg.mxu0
    %1118 = vmatpush.msra.mxu0 0.0
    %1119 = vmatpush.msra.mxu0 0.0
    %1120 = vmatpush.msra.mxu0 0.0
    %1121 = vmatpush.msra.mxu0 0.0
    %1122 = vmatpush.msra.mxu0 0.0
    %1123 = vmatpush.msra.mxu0 0.0
    %1124 = vmatpush.msra.mxu0 0.0
    %1125 = vmatpush.msra.mxu0 0.0
    %1126 = vmatpush.msra.mxu0 0.0
    %1127 = vmatpush.msra.mxu0 0.0
    %1128 = vmatpush.msra.mxu0 0.0
    %1129 = vmatpush.msra.mxu0 0.0
    %v1130 = vand.u32 %v708, 4294901760
    %1131 = vmatpush.msra.mxu0 %v1130
    %v1132 = vand.u32 %v707, 4294901760
    %1133 = vmatpush.msra.mxu0 %v1132
    %v1134 = vand.u32 %v706, 4294901760
    %1135 = vmatpush.msra.mxu0 %v1134
    %v1136 = vand.u32 %v705, 4294901760
    %1137 = vmatpush.msra.mxu0 %v1136
    %v1138 = vand.u32 %v956, 4294901760
    %1139 = vmatmul.f32.gmra.mxu0 %v1138
    %v1140 = vpop.f32.mrf.mxu0
    %v1141 = vadd.f32 %v1116, %v1140
    %1142 = vdwg.mxu0
    %v1143 = vadd.f32 %v952, %v1141
    %v1144 = vxor.u32 %v1143, 2147483648
    %v1145 = vmul.f32 %v1144, 1.442695
    %v1146 = vpow.pop %v1145
    %v1147 = vadd.f32 %v1146, 1.0
    %v1148 = vrcp.pop %v1147
    %v1149 = vmul.f32 %v1147, %v1148
    %v1150 = vsub.f32 1.0, %v1149
    %v1151 = vmul.f32 %v1148, %v1150
    %v1152 = vadd.f32 %v1148, %v1151
    %vm1153 = vweird.f32 %v1147
    %vm1154 = vweird.f32 %v1148
    %vm1155 = vmor %vm1153, %vm1154
    %v1156 = vsel %vm1155, %v1148, %v1152
    %v1157 = vand.u32 2147483647, %v1147
    %vm1158 = vcmp.eq.f32.partialorder %v1157, 8.507059e+37
    %v1159 = vand.u32 %v1147, 2147483648
    %v1160 = vor.u32 1.1754944e-38, %v1159
    %v1161 = vsel %vm1158, %v1160, %v1156
    %v1162 = vmul.f32 1.0, %v1161
    %v1163 = vmul.f32 %v1162, %v929
    %v1164 = vtanh.pop %v1143
    %1166 = vrot.lane.b32.xlu0 %v1164, 64
    %v1167 = vpop.permute.xlu0 %1166
    %v1169 = vmul.f32 %v277, %v1167
    %v1170 = vadd.f32 %v1163, %v1169
    %v1171 = vtanh.pop %v1170
    %1173 = vrot.lane.b32.xlu0 %v1171, 32
    %v1174 = vpop.permute.xlu0 %1173
    %v1176 = vmul.f32 %v1162, %v1174
    %v1177 = vmul.f32 %v1176, %v939
    %1179 = vrot.lane.b32.xlu0 %v1177, 96
    %v1180 = vpop.permute.xlu0 %1179
    %v1182 = vsel %vm713, %v1180, 0.0
    %1183 = vadd.xlane.f32.xlu0 %v1182
    %v1184 = vpop.xlane.xlu0 %1183
    %s1185 = scalar_lea.vmem [#allocation2], 2
    %v1186 = vld [vmem:[%s1185] ss:$8 sm:$0xf]
    %v1187 = vld [vmem:[%s1185] ss:$8 sm:$0xf0]
    %v1188 = vor.u32 %v1186, %v1187
    %1190 = vrot.lane.b32.xlu0 %v1176, 96
    %v1191 = vpop.permute.xlu0 %1190
    %v1192 = vsel %vm713, %v1191, 0
    %1194 = vmatpush.msra.mxu0 0.0
    %1195 = vmatpush.msra.mxu0 0.0
    %1196 = vmatpush.msra.mxu0 0.0
    %1197 = vmatpush.msra.mxu0 0.0
    %1198 = vmatpush.msra.mxu0 0.0
    %1199 = vmatpush.msra.mxu0 0.0
    %1200 = vmatpush.msra.mxu0 0.0
    %1201 = vmatpush.msra.mxu0 0.0
    %1202 = vmatpush.msra.mxu0 0.0
    %1203 = vmatpush.msra.mxu0 0.0
    %1204 = vmatpush.msra.mxu0 0.0
    %1205 = vmatpush.msra.mxu0 0.0
    %v1206 = vand.u32 %v708, 4294901760
    %1207 = vmatpush.msra.mxu0 %v1206
    %v1208 = vand.u32 %v707, 4294901760
    %1209 = vmatpush.msra.mxu0 %v1208
    %v1210 = vand.u32 %v706, 4294901760
    %1211 = vmatpush.msra.mxu0 %v1210
    %v1212 = vand.u32 %v705, 4294901760
    %1213 = vmatpush.msra.mxu0 %v1212
    %v1214 = vand.u32 %v1192, 4294901760
    %v1215 = vsub.f32 %v1192, %v1214
    %v1216 = vand.u32 %v1215, 4294901760
    %v1217 = vsub.f32 %v1215, %v1216
    %v1218 = vand.u32 %v1217, 4294901760
    %1219 = vmatmul.f32.gmra.mxu0 %v1218
    %v1220 = vpop.f32.mrf.mxu0
    %v1221 = vadd.f32 0.0, %v1220
    %1222 = vdwg.mxu0
    %1223 = vmatpush.msra.mxu0 0.0
    %1224 = vmatpush.msra.mxu0 0.0
    %1225 = vmatpush.msra.mxu0 0.0
    %1226 = vmatpush.msra.mxu0 0.0
    %1227 = vmatpush.msra.mxu0 0.0
    %1228 = vmatpush.msra.mxu0 0.0
    %1229 = vmatpush.msra.mxu0 0.0
    %1230 = vmatpush.msra.mxu0 0.0
    %1231 = vmatpush.msra.mxu0 0.0
    %1232 = vmatpush.msra.mxu0 0.0
    %1233 = vmatpush.msra.mxu0 0.0
    %1234 = vmatpush.msra.mxu0 0.0
    %v1235 = vand.u32 %v708, 4294901760
    %v1236 = vsub.f32 %v708, %v1235
    %v1237 = vand.u32 %v1236, 4294901760
    %v1238 = vsub.f32 %v1236, %v1237
    %v1239 = vand.u32 %v1238, 4294901760
    %1240 = vmatpush.msra.mxu0 %v1239
    %v1241 = vand.u32 %v707, 4294901760
    %v1242 = vsub.f32 %v707, %v1241
    %v1243 = vand.u32 %v1242, 4294901760
    %v1244 = vsub.f32 %v1242, %v1243
    %v1245 = vand.u32 %v1244, 4294901760
    %1246 = vmatpush.msra.mxu0 %v1245
    %v1247 = vand.u32 %v706, 4294901760
    %v1248 = vsub.f32 %v706, %v1247
    %v1249 = vand.u32 %v1248, 4294901760
    %v1250 = vsub.f32 %v1248, %v1249
    %v1251 = vand.u32 %v1250, 4294901760
    %1252 = vmatpush.msra.mxu0 %v1251
    %v1253 = vand.u32 %v705, 4294901760
    %v1254 = vsub.f32 %v705, %v1253
    %v1255 = vand.u32 %v1254, 4294901760
    %v1256 = vsub.f32 %v1254, %v1255
    %v1257 = vand.u32 %v1256, 4294901760
    %1258 = vmatpush.msra.mxu0 %v1257
    %v1259 = vand.u32 %v1192, 4294901760
    %1260 = vmatmul.f32.gmra.mxu0 %v1259
    %v1261 = vpop.f32.mrf.mxu0
    %v1262 = vadd.f32 %v1221, %v1261
    %1263 = vdwg.mxu0
    %1264 = vmatpush.msra.mxu0 0.0
    %1265 = vmatpush.msra.mxu0 0.0
    %1266 = vmatpush.msra.mxu0 0.0
    %1267 = vmatpush.msra.mxu0 0.0
    %1268 = vmatpush.msra.mxu0 0.0
    %1269 = vmatpush.msra.mxu0 0.0
    %1270 = vmatpush.msra.mxu0 0.0
    %1271 = vmatpush.msra.mxu0 0.0
    %1272 = vmatpush.msra.mxu0 0.0
    %1273 = vmatpush.msra.mxu0 0.0
    %1274 = vmatpush.msra.mxu0 0.0
    %1275 = vmatpush.msra.mxu0 0.0
    %v1276 = vand.u32 %v708, 4294901760
    %v1277 = vsub.f32 %v708, %v1276
    %1278 = vmatpush.msra.mxu0 %v1277
    %v1279 = vand.u32 %v707, 4294901760
    %v1280 = vsub.f32 %v707, %v1279
    %1281 = vmatpush.msra.mxu0 %v1280
    %v1282 = vand.u32 %v706, 4294901760
    %v1283 = vsub.f32 %v706, %v1282
    %1284 = vmatpush.msra.mxu0 %v1283
    %v1285 = vand.u32 %v705, 4294901760
    %v1286 = vsub.f32 %v705, %v1285
    %1287 = vmatpush.msra.mxu0 %v1286
    %v1288 = vand.u32 %v1192, 4294901760
    %v1289 = vsub.f32 %v1192, %v1288
    %1290 = vmatmul.f32.gmra.mxu0 %v1289
    %v1291 = vpop.f32.mrf.mxu0
    %v1292 = vadd.f32 %v1262, %v1291
    %1293 = vdwg.mxu0
    %1294 = vmatpush.msra.mxu0 0.0
    %1295 = vmatpush.msra.mxu0 0.0
    %1296 = vmatpush.msra.mxu0 0.0
    %1297 = vmatpush.msra.mxu0 0.0
    %1298 = vmatpush.msra.mxu0 0.0
    %1299 = vmatpush.msra.mxu0 0.0
    %1300 = vmatpush.msra.mxu0 0.0
    %1301 = vmatpush.msra.mxu0 0.0
    %1302 = vmatpush.msra.mxu0 0.0
    %1303 = vmatpush.msra.mxu0 0.0
    %1304 = vmatpush.msra.mxu0 0.0
    %1305 = vmatpush.msra.mxu0 0.0
    %v1306 = vand.u32 %v708, 4294901760
    %1307 = vmatpush.msra.mxu0 %v1306
    %v1308 = vand.u32 %v707, 4294901760
    %1309 = vmatpush.msra.mxu0 %v1308
    %v1310 = vand.u32 %v706, 4294901760
    %1311 = vmatpush.msra.mxu0 %v1310
    %v1312 = vand.u32 %v705, 4294901760
    %1313 = vmatpush.msra.mxu0 %v1312
    %v1314 = vand.u32 %v1192, 4294901760
    %v1315 = vsub.f32 %v1192, %v1314
    %v1316 = vand.u32 %v1315, 4294901760
    %1317 = vmatmul.f32.gmra.mxu0 %v1316
    %v1318 = vpop.f32.mrf.mxu0
    %v1319 = vadd.f32 %v1292, %v1318
    %1320 = vdwg.mxu0
    %1321 = vmatpush.msra.mxu0 0.0
    %1322 = vmatpush.msra.mxu0 0.0
    %1323 = vmatpush.msra.mxu0 0.0
    %1324 = vmatpush.msra.mxu0 0.0
    %1325 = vmatpush.msra.mxu0 0.0
    %1326 = vmatpush.msra.mxu0 0.0
    %1327 = vmatpush.msra.mxu0 0.0
    %1328 = vmatpush.msra.mxu0 0.0
    %1329 = vmatpush.msra.mxu0 0.0
    %1330 = vmatpush.msra.mxu0 0.0
    %1331 = vmatpush.msra.mxu0 0.0
    %1332 = vmatpush.msra.mxu0 0.0
    %v1333 = vand.u32 %v708, 4294901760
    %v1334 = vsub.f32 %v708, %v1333
    %v1335 = vand.u32 %v1334, 4294901760
    %1336 = vmatpush.msra.mxu0 %v1335
    %v1337 = vand.u32 %v707, 4294901760
    %v1338 = vsub.f32 %v707, %v1337
    %v1339 = vand.u32 %v1338, 4294901760
    %1340 = vmatpush.msra.mxu0 %v1339
    %v1341 = vand.u32 %v706, 4294901760
    %v1342 = vsub.f32 %v706, %v1341
    %v1343 = vand.u32 %v1342, 4294901760
    %1344 = vmatpush.msra.mxu0 %v1343
    %v1345 = vand.u32 %v705, 4294901760
    %v1346 = vsub.f32 %v705, %v1345
    %v1347 = vand.u32 %v1346, 4294901760
    %1348 = vmatpush.msra.mxu0 %v1347
    %v1349 = vand.u32 %v1192, 4294901760
    %1350 = vmatmul.f32.gmra.mxu0 %v1349
    %v1351 = vpop.f32.mrf.mxu0
    %v1352 = vadd.f32 %v1319, %v1351
    %1353 = vdwg.mxu0
    %1354 = vmatpush.msra.mxu0 0.0
    %1355 = vmatpush.msra.mxu0 0.0
    %1356 = vmatpush.msra.mxu0 0.0
    %1357 = vmatpush.msra.mxu0 0.0
    %1358 = vmatpush.msra.mxu0 0.0
    %1359 = vmatpush.msra.mxu0 0.0
    %1360 = vmatpush.msra.mxu0 0.0
    %1361 = vmatpush.msra.mxu0 0.0
    %1362 = vmatpush.msra.mxu0 0.0
    %1363 = vmatpush.msra.mxu0 0.0
    %1364 = vmatpush.msra.mxu0 0.0
    %1365 = vmatpush.msra.mxu0 0.0
    %v1366 = vand.u32 %v708, 4294901760
    %1367 = vmatpush.msra.mxu0 %v1366
    %v1368 = vand.u32 %v707, 4294901760
    %1369 = vmatpush.msra.mxu0 %v1368
    %v1370 = vand.u32 %v706, 4294901760
    %1371 = vmatpush.msra.mxu0 %v1370
    %v1372 = vand.u32 %v705, 4294901760
    %1373 = vmatpush.msra.mxu0 %v1372
    %v1374 = vand.u32 %v1192, 4294901760
    %1375 = vmatmul.f32.gmra.mxu0 %v1374
    %v1376 = vpop.f32.mrf.mxu0
    %v1377 = vadd.f32 %v1352, %v1376
    %1378 = vdwg.mxu0
    %v1379 = vadd.f32 %v1188, %v1377
    %v1380 = vxor.u32 %v1379, 2147483648
    %v1381 = vmul.f32 %v1380, 1.442695
    %v1382 = vpow.pop %v1381
    %v1383 = vadd.f32 %v1382, 1.0
    %v1384 = vrcp.pop %v1383
    %v1385 = vmul.f32 %v1383, %v1384
    %v1386 = vsub.f32 1.0, %v1385
    %v1387 = vmul.f32 %v1384, %v1386
    %v1388 = vadd.f32 %v1384, %v1387
    %vm1389 = vweird.f32 %v1383
    %vm1390 = vweird.f32 %v1384
    %vm1391 = vmor %vm1389, %vm1390
    %v1392 = vsel %vm1391, %v1384, %v1388
    %v1393 = vand.u32 2147483647, %v1383
    %vm1394 = vcmp.eq.f32.partialorder %v1393, 8.507059e+37
    %v1395 = vand.u32 %v1383, 2147483648
    %v1396 = vor.u32 1.1754944e-38, %v1395
    %v1397 = vsel %vm1394, %v1396, %v1392
    %v1398 = vmul.f32 1.0, %v1397
    %v1399 = vmul.f32 %v1398, %v1170
    %v1400 = vtanh.pop %v1379
    %1402 = vrot.lane.b32.xlu0 %v1400, 64
    %v1403 = vpop.permute.xlu0 %1402
    %v1405 = vmul.f32 %v277, %v1403
    %v1406 = vadd.f32 %v1399, %v1405
    %v1407 = vtanh.pop %v1406
    %1409 = vrot.lane.b32.xlu0 %v1407, 32
    %v1410 = vpop.permute.xlu0 %1409
    %v1412 = vmul.f32 %v1398, %v1410
    %v1413 = vmul.f32 %v1412, %v939
    %1415 = vrot.lane.b32.xlu0 %v1413, 96
    %v1416 = vpop.permute.xlu0 %1415
    %v1418 = vsel %vm713, %v1416, 0.0
    %1419 = vadd.xlane.f32.xlu0 %v1418
    %v1420 = vpop.xlane.xlu0 %1419
    %s1421 = scalar_lea.vmem [#allocation2], 3
    %v1422 = vld [vmem:[%s1421] ss:$8 sm:$0xf]
    %v1423 = vld [vmem:[%s1421] ss:$8 sm:$0xf0]
    %v1424 = vor.u32 %v1422, %v1423
    %1426 = vrot.lane.b32.xlu0 %v1412, 96
    %v1427 = vpop.permute.xlu0 %1426
    %v1428 = vsel %vm713, %v1427, 0
    %1430 = vmatpush.msra.mxu0 0.0
    %1431 = vmatpush.msra.mxu0 0.0
    %1432 = vmatpush.msra.mxu0 0.0
    %1433 = vmatpush.msra.mxu0 0.0
    %1434 = vmatpush.msra.mxu0 0.0
    %1435 = vmatpush.msra.mxu0 0.0
    %1436 = vmatpush.msra.mxu0 0.0
    %1437 = vmatpush.msra.mxu0 0.0
    %1438 = vmatpush.msra.mxu0 0.0
    %1439 = vmatpush.msra.mxu0 0.0
    %1440 = vmatpush.msra.mxu0 0.0
    %1441 = vmatpush.msra.mxu0 0.0
    %v1442 = vand.u32 %v708, 4294901760
    %1443 = vmatpush.msra.mxu0 %v1442
    %v1444 = vand.u32 %v707, 4294901760
    %1445 = vmatpush.msra.mxu0 %v1444
    %v1446 = vand.u32 %v706, 4294901760
    %1447 = vmatpush.msra.mxu0 %v1446
    %v1448 = vand.u32 %v705, 4294901760
    %1449 = vmatpush.msra.mxu0 %v1448
    %v1450 = vand.u32 %v1428, 4294901760
    %v1451 = vsub.f32 %v1428, %v1450
    %v1452 = vand.u32 %v1451, 4294901760
    %v1453 = vsub.f32 %v1451, %v1452
    %v1454 = vand.u32 %v1453, 4294901760
    %1455 = vmatmul.f32.gmra.mxu0 %v1454
    %v1456 = vpop.f32.mrf.mxu0
    %v1457 = vadd.f32 0.0, %v1456
    %1458 = vdwg.mxu0
    %1459 = vmatpush.msra.mxu0 0.0
    %1460 = vmatpush.msra.mxu0 0.0
    %1461 = vmatpush.msra.mxu0 0.0
    %1462 = vmatpush.msra.mxu0 0.0
    %1463 = vmatpush.msra.mxu0 0.0
    %1464 = vmatpush.msra.mxu0 0.0
    %1465 = vmatpush.msra.mxu0 0.0
    %1466 = vmatpush.msra.mxu0 0.0
    %1467 = vmatpush.msra.mxu0 0.0
    %1468 = vmatpush.msra.mxu0 0.0
    %1469 = vmatpush.msra.mxu0 0.0
    %1470 = vmatpush.msra.mxu0 0.0
    %v1471 = vand.u32 %v708, 4294901760
    %v1472 = vsub.f32 %v708, %v1471
    %v1473 = vand.u32 %v1472, 4294901760
    %v1474 = vsub.f32 %v1472, %v1473
    %v1475 = vand.u32 %v1474, 4294901760
    %1476 = vmatpush.msra.mxu0 %v1475
    %v1477 = vand.u32 %v707, 4294901760
    %v1478 = vsub.f32 %v707, %v1477
    %v1479 = vand.u32 %v1478, 4294901760
    %v1480 = vsub.f32 %v1478, %v1479
    %v1481 = vand.u32 %v1480, 4294901760
    %1482 = vmatpush.msra.mxu0 %v1481
    %v1483 = vand.u32 %v706, 4294901760
    %v1484 = vsub.f32 %v706, %v1483
    %v1485 = vand.u32 %v1484, 4294901760
    %v1486 = vsub.f32 %v1484, %v1485
    %v1487 = vand.u32 %v1486, 4294901760
    %1488 = vmatpush.msra.mxu0 %v1487
    %v1489 = vand.u32 %v705, 4294901760
    %v1490 = vsub.f32 %v705, %v1489
    %v1491 = vand.u32 %v1490, 4294901760
    %v1492 = vsub.f32 %v1490, %v1491
    %v1493 = vand.u32 %v1492, 4294901760
    %1494 = vmatpush.msra.mxu0 %v1493
    %v1495 = vand.u32 %v1428, 4294901760
    %1496 = vmatmul.f32.gmra.mxu0 %v1495
    %v1497 = vpop.f32.mrf.mxu0
    %v1498 = vadd.f32 %v1457, %v1497
    %1499 = vdwg.mxu0
    %1500 = vmatpush.msra.mxu0 0.0
    %1501 = vmatpush.msra.mxu0 0.0
    %1502 = vmatpush.msra.mxu0 0.0
    %1503 = vmatpush.msra.mxu0 0.0
    %1504 = vmatpush.msra.mxu0 0.0
    %1505 = vmatpush.msra.mxu0 0.0
    %1506 = vmatpush.msra.mxu0 0.0
    %1507 = vmatpush.msra.mxu0 0.0
    %1508 = vmatpush.msra.mxu0 0.0
    %1509 = vmatpush.msra.mxu0 0.0
    %1510 = vmatpush.msra.mxu0 0.0
    %1511 = vmatpush.msra.mxu0 0.0
    %v1512 = vand.u32 %v708, 4294901760
    %v1513 = vsub.f32 %v708, %v1512
    %1514 = vmatpush.msra.mxu0 %v1513
    %v1515 = vand.u32 %v707, 4294901760
    %v1516 = vsub.f32 %v707, %v1515
    %1517 = vmatpush.msra.mxu0 %v1516
    %v1518 = vand.u32 %v706, 4294901760
    %v1519 = vsub.f32 %v706, %v1518
    %1520 = vmatpush.msra.mxu0 %v1519
    %v1521 = vand.u32 %v705, 4294901760
    %v1522 = vsub.f32 %v705, %v1521
    %1523 = vmatpush.msra.mxu0 %v1522
    %v1524 = vand.u32 %v1428, 4294901760
    %v1525 = vsub.f32 %v1428, %v1524
    %1526 = vmatmul.f32.gmra.mxu0 %v1525
    %v1527 = vpop.f32.mrf.mxu0
    %v1528 = vadd.f32 %v1498, %v1527
    %1529 = vdwg.mxu0
    %1530 = vmatpush.msra.mxu0 0.0
    %1531 = vmatpush.msra.mxu0 0.0
    %1532 = vmatpush.msra.mxu0 0.0
    %1533 = vmatpush.msra.mxu0 0.0
    %1534 = vmatpush.msra.mxu0 0.0
    %1535 = vmatpush.msra.mxu0 0.0
    %1536 = vmatpush.msra.mxu0 0.0
    %1537 = vmatpush.msra.mxu0 0.0
    %1538 = vmatpush.msra.mxu0 0.0
    %1539 = vmatpush.msra.mxu0 0.0
    %1540 = vmatpush.msra.mxu0 0.0
    %1541 = vmatpush.msra.mxu0 0.0
    %v1542 = vand.u32 %v708, 4294901760
    %1543 = vmatpush.msra.mxu0 %v1542
    %v1544 = vand.u32 %v707, 4294901760
    %1545 = vmatpush.msra.mxu0 %v1544
    %v1546 = vand.u32 %v706, 4294901760
    %1547 = vmatpush.msra.mxu0 %v1546
    %v1548 = vand.u32 %v705, 4294901760
    %1549 = vmatpush.msra.mxu0 %v1548
    %v1550 = vand.u32 %v1428, 4294901760
    %v1551 = vsub.f32 %v1428, %v1550
    %v1552 = vand.u32 %v1551, 4294901760
    %1553 = vmatmul.f32.gmra.mxu0 %v1552
    %v1554 = vpop.f32.mrf.mxu0
    %v1555 = vadd.f32 %v1528, %v1554
    %1556 = vdwg.mxu0
    %1557 = vmatpush.msra.mxu0 0.0
    %1558 = vmatpush.msra.mxu0 0.0
    %1559 = vmatpush.msra.mxu0 0.0
    %1560 = vmatpush.msra.mxu0 0.0
    %1561 = vmatpush.msra.mxu0 0.0
    %1562 = vmatpush.msra.mxu0 0.0
    %1563 = vmatpush.msra.mxu0 0.0
    %1564 = vmatpush.msra.mxu0 0.0
    %1565 = vmatpush.msra.mxu0 0.0
    %1566 = vmatpush.msra.mxu0 0.0
    %1567 = vmatpush.msra.mxu0 0.0
    %1568 = vmatpush.msra.mxu0 0.0
    %v1569 = vand.u32 %v708, 4294901760
    %v1570 = vsub.f32 %v708, %v1569
    %v1571 = vand.u32 %v1570, 4294901760
    %1572 = vmatpush.msra.mxu0 %v1571
    %v1573 = vand.u32 %v707, 4294901760
    %v1574 = vsub.f32 %v707, %v1573
    %v1575 = vand.u32 %v1574, 4294901760
    %1576 = vmatpush.msra.mxu0 %v1575
    %v1577 = vand.u32 %v706, 4294901760
    %v1578 = vsub.f32 %v706, %v1577
    %v1579 = vand.u32 %v1578, 4294901760
    %1580 = vmatpush.msra.mxu0 %v1579
    %v1581 = vand.u32 %v705, 4294901760
    %v1582 = vsub.f32 %v705, %v1581
    %v1583 = vand.u32 %v1582, 4294901760
    %1584 = vmatpush.msra.mxu0 %v1583
    %v1585 = vand.u32 %v1428, 4294901760
    %1586 = vmatmul.f32.gmra.mxu0 %v1585
    %v1587 = vpop.f32.mrf.mxu0
    %v1588 = vadd.f32 %v1555, %v1587
    %1589 = vdwg.mxu0
    %1590 = vmatpush.msra.mxu0 0.0
    %1591 = vmatpush.msra.mxu0 0.0
    %1592 = vmatpush.msra.mxu0 0.0
    %1593 = vmatpush.msra.mxu0 0.0
    %1594 = vmatpush.msra.mxu0 0.0
    %1595 = vmatpush.msra.mxu0 0.0
    %1596 = vmatpush.msra.mxu0 0.0
    %1597 = vmatpush.msra.mxu0 0.0
    %1598 = vmatpush.msra.mxu0 0.0
    %1599 = vmatpush.msra.mxu0 0.0
    %1600 = vmatpush.msra.mxu0 0.0
    %1601 = vmatpush.msra.mxu0 0.0
    %v1602 = vand.u32 %v708, 4294901760
    %1603 = vmatpush.msra.mxu0 %v1602
    %v1604 = vand.u32 %v707, 4294901760
    %1605 = vmatpush.msra.mxu0 %v1604
    %v1606 = vand.u32 %v706, 4294901760
    %1607 = vmatpush.msra.mxu0 %v1606
    %v1608 = vand.u32 %v705, 4294901760
    %1609 = vmatpush.msra.mxu0 %v1608
    %v1610 = vand.u32 %v1428, 4294901760
    %1611 = vmatmul.f32.gmra.mxu0 %v1610
    %v1612 = vpop.f32.mrf.mxu0
    %v1613 = vadd.f32 %v1588, %v1612
    %1614 = vdwg.mxu0
    %v1615 = vadd.f32 %v1424, %v1613
    %v1616 = vxor.u32 %v1615, 2147483648
    %v1617 = vmul.f32 %v1616, 1.442695
    %v1618 = vpow.pop %v1617
    %v1619 = vadd.f32 %v1618, 1.0
    %v1620 = vrcp.pop %v1619
    %v1621 = vmul.f32 %v1619, %v1620
    %v1622 = vsub.f32 1.0, %v1621
    %v1623 = vmul.f32 %v1620, %v1622
    %v1624 = vadd.f32 %v1620, %v1623
    %vm1625 = vweird.f32 %v1619
    %vm1626 = vweird.f32 %v1620
    %vm1627 = vmor %vm1625, %vm1626
    %v1628 = vsel %vm1627, %v1620, %v1624
    %v1629 = vand.u32 2147483647, %v1619
    %vm1630 = vcmp.eq.f32.partialorder %v1629, 8.507059e+37
    %v1631 = vand.u32 %v1619, 2147483648
    %v1632 = vor.u32 1.1754944e-38, %v1631
    %v1633 = vsel %vm1630, %v1632, %v1628
    %v1634 = vmul.f32 1.0, %v1633
    %v1635 = vmul.f32 %v1634, %v1406
    %v1636 = vtanh.pop %v1615
    %1638 = vrot.lane.b32.xlu0 %v1636, 64
    %v1639 = vpop.permute.xlu0 %1638
    %v1641 = vmul.f32 %v277, %v1639
    %v1642 = vadd.f32 %v1635, %v1641
    %v1643 = vtanh.pop %v1642
    %1645 = vrot.lane.b32.xlu0 %v1643, 32
    %v1646 = vpop.permute.xlu0 %1645
    %v1648 = vmul.f32 %v1634, %v1646
    %v1649 = vmul.f32 %v1648, %v939
    %1651 = vrot.lane.b32.xlu0 %v1649, 96
    %v1652 = vpop.permute.xlu0 %1651
    %v1654 = vsel %vm713, %v1652, 0.0
    %1655 = vadd.xlane.f32.xlu0 %v1654
    %v1656 = vpop.xlane.xlu0 %1655
    %s1657 = scalar_lea.vmem [#allocation2], 4
    %v1658 = vld [vmem:[%s1657] ss:$8 sm:$0xf]
    %v1659 = vld [vmem:[%s1657] ss:$8 sm:$0xf0]
    %v1660 = vor.u32 %v1658, %v1659
    %1662 = vrot.lane.b32.xlu0 %v1648, 96
    %v1663 = vpop.permute.xlu0 %1662
    %v1664 = vsel %vm713, %v1663, 0
    %1666 = vmatpush.msra.mxu0 0.0
    %1667 = vmatpush.msra.mxu0 0.0
    %1668 = vmatpush.msra.mxu0 0.0
    %1669 = vmatpush.msra.mxu0 0.0
    %1670 = vmatpush.msra.mxu0 0.0
    %1671 = vmatpush.msra.mxu0 0.0
    %1672 = vmatpush.msra.mxu0 0.0
    %1673 = vmatpush.msra.mxu0 0.0
    %1674 = vmatpush.msra.mxu0 0.0
    %1675 = vmatpush.msra.mxu0 0.0
    %1676 = vmatpush.msra.mxu0 0.0
    %1677 = vmatpush.msra.mxu0 0.0
    %v1678 = vand.u32 %v708, 4294901760
    %1679 = vmatpush.msra.mxu0 %v1678
    %v1680 = vand.u32 %v707, 4294901760
    %1681 = vmatpush.msra.mxu0 %v1680
    %v1682 = vand.u32 %v706, 4294901760
    %1683 = vmatpush.msra.mxu0 %v1682
    %v1684 = vand.u32 %v705, 4294901760
    %1685 = vmatpush.msra.mxu0 %v1684
    %v1686 = vand.u32 %v1664, 4294901760
    %v1687 = vsub.f32 %v1664, %v1686
    %v1688 = vand.u32 %v1687, 4294901760
    %v1689 = vsub.f32 %v1687, %v1688
    %v1690 = vand.u32 %v1689, 4294901760
    %1691 = vmatmul.f32.gmra.mxu0 %v1690
    %v1692 = vpop.f32.mrf.mxu0
    %v1693 = vadd.f32 0.0, %v1692
    %1694 = vdwg.mxu0
    %1695 = vmatpush.msra.mxu0 0.0
    %1696 = vmatpush.msra.mxu0 0.0
    %1697 = vmatpush.msra.mxu0 0.0
    %1698 = vmatpush.msra.mxu0 0.0
    %1699 = vmatpush.msra.mxu0 0.0
    %1700 = vmatpush.msra.mxu0 0.0
    %1701 = vmatpush.msra.mxu0 0.0
    %1702 = vmatpush.msra.mxu0 0.0
    %1703 = vmatpush.msra.mxu0 0.0
    %1704 = vmatpush.msra.mxu0 0.0
    %1705 = vmatpush.msra.mxu0 0.0
    %1706 = vmatpush.msra.mxu0 0.0
    %v1707 = vand.u32 %v708, 4294901760
    %v1708 = vsub.f32 %v708, %v1707
    %v1709 = vand.u32 %v1708, 4294901760
    %v1710 = vsub.f32 %v1708, %v1709
    %v1711 = vand.u32 %v1710, 4294901760
    %1712 = vmatpush.msra.mxu0 %v1711
    %v1713 = vand.u32 %v707, 4294901760
    %v1714 = vsub.f32 %v707, %v1713
    %v1715 = vand.u32 %v1714, 4294901760
    %v1716 = vsub.f32 %v1714, %v1715
    %v1717 = vand.u32 %v1716, 4294901760
    %1718 = vmatpush.msra.mxu0 %v1717
    %v1719 = vand.u32 %v706, 4294901760
    %v1720 = vsub.f32 %v706, %v1719
    %v1721 = vand.u32 %v1720, 4294901760
    %v1722 = vsub.f32 %v1720, %v1721
    %v1723 = vand.u32 %v1722, 4294901760
    %1724 = vmatpush.msra.mxu0 %v1723
    %v1725 = vand.u32 %v705, 4294901760
    %v1726 = vsub.f32 %v705, %v1725
    %v1727 = vand.u32 %v1726, 4294901760
    %v1728 = vsub.f32 %v1726, %v1727
    %v1729 = vand.u32 %v1728, 4294901760
    %1730 = vmatpush.msra.mxu0 %v1729
    %v1731 = vand.u32 %v1664, 4294901760
    %1732 = vmatmul.f32.gmra.mxu0 %v1731
    %v1733 = vpop.f32.mrf.mxu0
    %v1734 = vadd.f32 %v1693, %v1733
    %1735 = vdwg.mxu0
    %1736 = vmatpush.msra.mxu0 0.0
    %1737 = vmatpush.msra.mxu0 0.0
    %1738 = vmatpush.msra.mxu0 0.0
    %1739 = vmatpush.msra.mxu0 0.0
    %1740 = vmatpush.msra.mxu0 0.0
    %1741 = vmatpush.msra.mxu0 0.0
    %1742 = vmatpush.msra.mxu0 0.0
    %1743 = vmatpush.msra.mxu0 0.0
    %1744 = vmatpush.msra.mxu0 0.0
    %1745 = vmatpush.msra.mxu0 0.0
    %1746 = vmatpush.msra.mxu0 0.0
    %1747 = vmatpush.msra.mxu0 0.0
    %v1748 = vand.u32 %v708, 4294901760
    %v1749 = vsub.f32 %v708, %v1748
    %1750 = vmatpush.msra.mxu0 %v1749
    %v1751 = vand.u32 %v707, 4294901760
    %v1752 = vsub.f32 %v707, %v1751
    %1753 = vmatpush.msra.mxu0 %v1752
    %v1754 = vand.u32 %v706, 4294901760
    %v1755 = vsub.f32 %v706, %v1754
    %1756 = vmatpush.msra.mxu0 %v1755
    %v1757 = vand.u32 %v705, 4294901760
    %v1758 = vsub.f32 %v705, %v1757
    %1759 = vmatpush.msra.mxu0 %v1758
    %v1760 = vand.u32 %v1664, 4294901760
    %v1761 = vsub.f32 %v1664, %v1760
    %1762 = vmatmul.f32.gmra.mxu0 %v1761
    %v1763 = vpop.f32.mrf.mxu0
    %v1764 = vadd.f32 %v1734, %v1763
    %1765 = vdwg.mxu0
    %1766 = vmatpush.msra.mxu0 0.0
    %1767 = vmatpush.msra.mxu0 0.0
    %1768 = vmatpush.msra.mxu0 0.0
    %1769 = vmatpush.msra.mxu0 0.0
    %1770 = vmatpush.msra.mxu0 0.0
    %1771 = vmatpush.msra.mxu0 0.0
    %1772 = vmatpush.msra.mxu0 0.0
    %1773 = vmatpush.msra.mxu0 0.0
    %1774 = vmatpush.msra.mxu0 0.0
    %1775 = vmatpush.msra.mxu0 0.0
    %1776 = vmatpush.msra.mxu0 0.0
    %1777 = vmatpush.msra.mxu0 0.0
    %v1778 = vand.u32 %v708, 4294901760
    %1779 = vmatpush.msra.mxu0 %v1778
    %v1780 = vand.u32 %v707, 4294901760
    %1781 = vmatpush.msra.mxu0 %v1780
    %v1782 = vand.u32 %v706, 4294901760
    %1783 = vmatpush.msra.mxu0 %v1782
    %v1784 = vand.u32 %v705, 4294901760
    %1785 = vmatpush.msra.mxu0 %v1784
    %v1786 = vand.u32 %v1664, 4294901760
    %v1787 = vsub.f32 %v1664, %v1786
    %v1788 = vand.u32 %v1787, 4294901760
    %1789 = vmatmul.f32.gmra.mxu0 %v1788
    %v1790 = vpop.f32.mrf.mxu0
    %v1791 = vadd.f32 %v1764, %v1790
    %1792 = vdwg.mxu0
    %1793 = vmatpush.msra.mxu0 0.0
    %1794 = vmatpush.msra.mxu0 0.0
    %1795 = vmatpush.msra.mxu0 0.0
    %1796 = vmatpush.msra.mxu0 0.0
    %1797 = vmatpush.msra.mxu0 0.0
    %1798 = vmatpush.msra.mxu0 0.0
    %1799 = vmatpush.msra.mxu0 0.0
    %1800 = vmatpush.msra.mxu0 0.0
    %1801 = vmatpush.msra.mxu0 0.0
    %1802 = vmatpush.msra.mxu0 0.0
    %1803 = vmatpush.msra.mxu0 0.0
    %1804 = vmatpush.msra.mxu0 0.0
    %v1805 = vand.u32 %v708, 4294901760
    %v1806 = vsub.f32 %v708, %v1805
    %v1807 = vand.u32 %v1806, 4294901760
    %1808 = vmatpush.msra.mxu0 %v1807
    %v1809 = vand.u32 %v707, 4294901760
    %v1810 = vsub.f32 %v707, %v1809
    %v1811 = vand.u32 %v1810, 4294901760
    %1812 = vmatpush.msra.mxu0 %v1811
    %v1813 = vand.u32 %v706, 4294901760
    %v1814 = vsub.f32 %v706, %v1813
    %v1815 = vand.u32 %v1814, 4294901760
    %1816 = vmatpush.msra.mxu0 %v1815
    %v1817 = vand.u32 %v705, 4294901760
    %v1818 = vsub.f32 %v705, %v1817
    %v1819 = vand.u32 %v1818, 4294901760
    %1820 = vmatpush.msra.mxu0 %v1819
    %v1821 = vand.u32 %v1664, 4294901760
    %1822 = vmatmul.f32.gmra.mxu0 %v1821
    %v1823 = vpop.f32.mrf.mxu0
    %v1824 = vadd.f32 %v1791, %v1823
    %1825 = vdwg.mxu0
    %1826 = vmatpush.msra.mxu0 0.0
    %1827 = vmatpush.msra.mxu0 0.0
    %1828 = vmatpush.msra.mxu0 0.0
    %1829 = vmatpush.msra.mxu0 0.0
    %1830 = vmatpush.msra.mxu0 0.0
    %1831 = vmatpush.msra.mxu0 0.0
    %1832 = vmatpush.msra.mxu0 0.0
    %1833 = vmatpush.msra.mxu0 0.0
    %1834 = vmatpush.msra.mxu0 0.0
    %1835 = vmatpush.msra.mxu0 0.0
    %1836 = vmatpush.msra.mxu0 0.0
    %1837 = vmatpush.msra.mxu0 0.0
    %v1838 = vand.u32 %v708, 4294901760
    %1839 = vmatpush.msra.mxu0 %v1838
    %v1840 = vand.u32 %v707, 4294901760
    %1841 = vmatpush.msra.mxu0 %v1840
    %v1842 = vand.u32 %v706, 4294901760
    %1843 = vmatpush.msra.mxu0 %v1842
    %v1844 = vand.u32 %v705, 4294901760
    %1845 = vmatpush.msra.mxu0 %v1844
    %v1846 = vand.u32 %v1664, 4294901760
    %1847 = vmatmul.f32.gmra.mxu0 %v1846
    %v1848 = vpop.f32.mrf.mxu0
    %v1849 = vadd.f32 %v1824, %v1848
    %1850 = vdwg.mxu0
    %v1851 = vadd.f32 %v1660, %v1849
    %v1852 = vxor.u32 %v1851, 2147483648
    %v1853 = vmul.f32 %v1852, 1.442695
    %v1854 = vpow.pop %v1853
    %v1855 = vadd.f32 %v1854, 1.0
    %v1856 = vrcp.pop %v1855
    %v1857 = vmul.f32 %v1855, %v1856
    %v1858 = vsub.f32 1.0, %v1857
    %v1859 = vmul.f32 %v1856, %v1858
    %v1860 = vadd.f32 %v1856, %v1859
    %vm1861 = vweird.f32 %v1855
    %vm1862 = vweird.f32 %v1856
    %vm1863 = vmor %vm1861, %vm1862
    %v1864 = vsel %vm1863, %v1856, %v1860
    %v1865 = vand.u32 2147483647, %v1855
    %vm1866 = vcmp.eq.f32.partialorder %v1865, 8.507059e+37
    %v1867 = vand.u32 %v1855, 2147483648
    %v1868 = vor.u32 1.1754944e-38, %v1867
    %v1869 = vsel %vm1866, %v1868, %v1864
    %v1870 = vmul.f32 1.0, %v1869
    %v1871 = vmul.f32 %v1870, %v1642
    %v1872 = vtanh.pop %v1851
    %1874 = vrot.lane.b32.xlu0 %v1872, 64
    %v1875 = vpop.permute.xlu0 %1874
    %v1877 = vmul.f32 %v277, %v1875
    %v1878 = vadd.f32 %v1871, %v1877
    %v1879 = vtanh.pop %v1878
    %1881 = vrot.lane.b32.xlu0 %v1879, 32
    %v1882 = vpop.permute.xlu0 %1881
    %v1884 = vmul.f32 %v1870, %v1882
    %v1885 = vmul.f32 %v1884, %v939
    %1887 = vrot.lane.b32.xlu0 %v1885, 96
    %v1888 = vpop.permute.xlu0 %1887
    %v1890 = vsel %vm713, %v1888, 0.0
    %1891 = vadd.xlane.f32.xlu0 %v1890
    %v1892 = vpop.xlane.xlu0 %1891
    %s1893 = scalar_lea.vmem [#allocation2], 5
    %v1894 = vld [vmem:[%s1893] ss:$8 sm:$0xf]
    %v1895 = vld [vmem:[%s1893] ss:$8 sm:$0xf0]
    %v1896 = vor.u32 %v1894, %v1895
    %1898 = vrot.lane.b32.xlu0 %v1884, 96
    %v1899 = vpop.permute.xlu0 %1898
    %v1900 = vsel %vm713, %v1899, 0
    %1902 = vmatpush.msra.mxu0 0.0
    %1903 = vmatpush.msra.mxu0 0.0
    %1904 = vmatpush.msra.mxu0 0.0
    %1905 = vmatpush.msra.mxu0 0.0
    %1906 = vmatpush.msra.mxu0 0.0
    %1907 = vmatpush.msra.mxu0 0.0
    %1908 = vmatpush.msra.mxu0 0.0
    %1909 = vmatpush.msra.mxu0 0.0
    %1910 = vmatpush.msra.mxu0 0.0
    %1911 = vmatpush.msra.mxu0 0.0
    %1912 = vmatpush.msra.mxu0 0.0
    %1913 = vmatpush.msra.mxu0 0.0
    %v1914 = vand.u32 %v708, 4294901760
    %1915 = vmatpush.msra.mxu0 %v1914
    %v1916 = vand.u32 %v707, 4294901760
    %1917 = vmatpush.msra.mxu0 %v1916
    %v1918 = vand.u32 %v706, 4294901760
    %1919 = vmatpush.msra.mxu0 %v1918
    %v1920 = vand.u32 %v705, 4294901760
    %1921 = vmatpush.msra.mxu0 %v1920
    %v1922 = vand.u32 %v1900, 4294901760
    %v1923 = vsub.f32 %v1900, %v1922
    %v1924 = vand.u32 %v1923, 4294901760
    %v1925 = vsub.f32 %v1923, %v1924
    %v1926 = vand.u32 %v1925, 4294901760
    %1927 = vmatmul.f32.gmra.mxu0 %v1926
    %v1928 = vpop.f32.mrf.mxu0
    %v1929 = vadd.f32 0.0, %v1928
    %1930 = vdwg.mxu0
    %1931 = vmatpush.msra.mxu0 0.0
    %1932 = vmatpush.msra.mxu0 0.0
    %1933 = vmatpush.msra.mxu0 0.0
    %1934 = vmatpush.msra.mxu0 0.0
    %1935 = vmatpush.msra.mxu0 0.0
    %1936 = vmatpush.msra.mxu0 0.0
    %1937 = vmatpush.msra.mxu0 0.0
    %1938 = vmatpush.msra.mxu0 0.0
    %1939 = vmatpush.msra.mxu0 0.0
    %1940 = vmatpush.msra.mxu0 0.0
    %1941 = vmatpush.msra.mxu0 0.0
    %1942 = vmatpush.msra.mxu0 0.0
    %v1943 = vand.u32 %v708, 4294901760
    %v1944 = vsub.f32 %v708, %v1943
    %v1945 = vand.u32 %v1944, 4294901760
    %v1946 = vsub.f32 %v1944, %v1945
    %v1947 = vand.u32 %v1946, 4294901760
    %1948 = vmatpush.msra.mxu0 %v1947
    %v1949 = vand.u32 %v707, 4294901760
    %v1950 = vsub.f32 %v707, %v1949
    %v1951 = vand.u32 %v1950, 4294901760
    %v1952 = vsub.f32 %v1950, %v1951
    %v1953 = vand.u32 %v1952, 4294901760
    %1954 = vmatpush.msra.mxu0 %v1953
    %v1955 = vand.u32 %v706, 4294901760
    %v1956 = vsub.f32 %v706, %v1955
    %v1957 = vand.u32 %v1956, 4294901760
    %v1958 = vsub.f32 %v1956, %v1957
    %v1959 = vand.u32 %v1958, 4294901760
    %1960 = vmatpush.msra.mxu0 %v1959
    %v1961 = vand.u32 %v705, 4294901760
    %v1962 = vsub.f32 %v705, %v1961
    %v1963 = vand.u32 %v1962, 4294901760
    %v1964 = vsub.f32 %v1962, %v1963
    %v1965 = vand.u32 %v1964, 4294901760
    %1966 = vmatpush.msra.mxu0 %v1965
    %v1967 = vand.u32 %v1900, 4294901760
    %1968 = vmatmul.f32.gmra.mxu0 %v1967
    %v1969 = vpop.f32.mrf.mxu0
    %v1970 = vadd.f32 %v1929, %v1969
    %1971 = vdwg.mxu0
    %1972 = vmatpush.msra.mxu0 0.0
    %1973 = vmatpush.msra.mxu0 0.0
    %1974 = vmatpush.msra.mxu0 0.0
    %1975 = vmatpush.msra.mxu0 0.0
    %1976 = vmatpush.msra.mxu0 0.0
    %1977 = vmatpush.msra.mxu0 0.0
    %1978 = vmatpush.msra.mxu0 0.0
    %1979 = vmatpush.msra.mxu0 0.0
    %1980 = vmatpush.msra.mxu0 0.0
    %1981 = vmatpush.msra.mxu0 0.0
    %1982 = vmatpush.msra.mxu0 0.0
    %1983 = vmatpush.msra.mxu0 0.0
    %v1984 = vand.u32 %v708, 4294901760
    %v1985 = vsub.f32 %v708, %v1984
    %1986 = vmatpush.msra.mxu0 %v1985
    %v1987 = vand.u32 %v707, 4294901760
    %v1988 = vsub.f32 %v707, %v1987
    %1989 = vmatpush.msra.mxu0 %v1988
    %v1990 = vand.u32 %v706, 4294901760
    %v1991 = vsub.f32 %v706, %v1990
    %1992 = vmatpush.msra.mxu0 %v1991
    %v1993 = vand.u32 %v705, 4294901760
    %v1994 = vsub.f32 %v705, %v1993
    %1995 = vmatpush.msra.mxu0 %v1994
    %v1996 = vand.u32 %v1900, 4294901760
    %v1997 = vsub.f32 %v1900, %v1996
    %1998 = vmatmul.f32.gmra.mxu0 %v1997
    %v1999 = vpop.f32.mrf.mxu0
    %v2000 = vadd.f32 %v1970, %v1999
    %2001 = vdwg.mxu0
    %2002 = vmatpush.msra.mxu0 0.0
    %2003 = vmatpush.msra.mxu0 0.0
    %2004 = vmatpush.msra.mxu0 0.0
    %2005 = vmatpush.msra.mxu0 0.0
    %2006 = vmatpush.msra.mxu0 0.0
    %2007 = vmatpush.msra.mxu0 0.0
    %2008 = vmatpush.msra.mxu0 0.0
    %2009 = vmatpush.msra.mxu0 0.0
    %2010 = vmatpush.msra.mxu0 0.0
    %2011 = vmatpush.msra.mxu0 0.0
    %2012 = vmatpush.msra.mxu0 0.0
    %2013 = vmatpush.msra.mxu0 0.0
    %v2014 = vand.u32 %v708, 4294901760
    %2015 = vmatpush.msra.mxu0 %v2014
    %v2016 = vand.u32 %v707, 4294901760
    %2017 = vmatpush.msra.mxu0 %v2016
    %v2018 = vand.u32 %v706, 4294901760
    %2019 = vmatpush.msra.mxu0 %v2018
    %v2020 = vand.u32 %v705, 4294901760
    %2021 = vmatpush.msra.mxu0 %v2020
    %v2022 = vand.u32 %v1900, 4294901760
    %v2023 = vsub.f32 %v1900, %v2022
    %v2024 = vand.u32 %v2023, 4294901760
    %2025 = vmatmul.f32.gmra.mxu0 %v2024
    %v2026 = vpop.f32.mrf.mxu0
    %v2027 = vadd.f32 %v2000, %v2026
    %2028 = vdwg.mxu0
    %2029 = vmatpush.msra.mxu0 0.0
    %2030 = vmatpush.msra.mxu0 0.0
    %2031 = vmatpush.msra.mxu0 0.0
    %2032 = vmatpush.msra.mxu0 0.0
    %2033 = vmatpush.msra.mxu0 0.0
    %2034 = vmatpush.msra.mxu0 0.0
    %2035 = vmatpush.msra.mxu0 0.0
    %2036 = vmatpush.msra.mxu0 0.0
    %2037 = vmatpush.msra.mxu0 0.0
    %2038 = vmatpush.msra.mxu0 0.0
    %2039 = vmatpush.msra.mxu0 0.0
    %2040 = vmatpush.msra.mxu0 0.0
    %v2041 = vand.u32 %v708, 4294901760
    %v2042 = vsub.f32 %v708, %v2041
    %v2043 = vand.u32 %v2042, 4294901760
    %2044 = vmatpush.msra.mxu0 %v2043
    %v2045 = vand.u32 %v707, 4294901760
    %v2046 = vsub.f32 %v707, %v2045
    %v2047 = vand.u32 %v2046, 4294901760
    %2048 = vmatpush.msra.mxu0 %v2047
    %v2049 = vand.u32 %v706, 4294901760
    %v2050 = vsub.f32 %v706, %v2049
    %v2051 = vand.u32 %v2050, 4294901760
    %2052 = vmatpush.msra.mxu0 %v2051
    %v2053 = vand.u32 %v705, 4294901760
    %v2054 = vsub.f32 %v705, %v2053
    %v2055 = vand.u32 %v2054, 4294901760
    %2056 = vmatpush.msra.mxu0 %v2055
    %v2057 = vand.u32 %v1900, 4294901760
    %2058 = vmatmul.f32.gmra.mxu0 %v2057
    %v2059 = vpop.f32.mrf.mxu0
    %v2060 = vadd.f32 %v2027, %v2059
    %2061 = vdwg.mxu0
    %2062 = vmatpush.msra.mxu0 0.0
    %2063 = vmatpush.msra.mxu0 0.0
    %2064 = vmatpush.msra.mxu0 0.0
    %2065 = vmatpush.msra.mxu0 0.0
    %2066 = vmatpush.msra.mxu0 0.0
    %2067 = vmatpush.msra.mxu0 0.0
    %2068 = vmatpush.msra.mxu0 0.0
    %2069 = vmatpush.msra.mxu0 0.0
    %2070 = vmatpush.msra.mxu0 0.0
    %2071 = vmatpush.msra.mxu0 0.0
    %2072 = vmatpush.msra.mxu0 0.0
    %2073 = vmatpush.msra.mxu0 0.0
    %v2074 = vand.u32 %v708, 4294901760
    %2075 = vmatpush.msra.mxu0 %v2074
    %v2076 = vand.u32 %v707, 4294901760
    %2077 = vmatpush.msra.mxu0 %v2076
    %v2078 = vand.u32 %v706, 4294901760
    %2079 = vmatpush.msra.mxu0 %v2078
    %v2080 = vand.u32 %v705, 4294901760
    %2081 = vmatpush.msra.mxu0 %v2080
    %v2082 = vand.u32 %v1900, 4294901760
    %2083 = vmatmul.f32.gmra.mxu0 %v2082
    %v2084 = vpop.f32.mrf.mxu0
    %v2085 = vadd.f32 %v2060, %v2084
    %2086 = vdwg.mxu0
    %v2087 = vadd.f32 %v1896, %v2085
    %v2088 = vxor.u32 %v2087, 2147483648
    %v2089 = vmul.f32 %v2088, 1.442695
    %v2090 = vpow.pop %v2089
    %v2091 = vadd.f32 %v2090, 1.0
    %v2092 = vrcp.pop %v2091
    %v2093 = vmul.f32 %v2091, %v2092
    %v2094 = vsub.f32 1.0, %v2093
    %v2095 = vmul.f32 %v2092, %v2094
    %v2096 = vadd.f32 %v2092, %v2095
    %vm2097 = vweird.f32 %v2091
    %vm2098 = vweird.f32 %v2092
    %vm2099 = vmor %vm2097, %vm2098
    %v2100 = vsel %vm2099, %v2092, %v2096
    %v2101 = vand.u32 2147483647, %v2091
    %vm2102 = vcmp.eq.f32.partialorder %v2101, 8.507059e+37
    %v2103 = vand.u32 %v2091, 2147483648
    %v2104 = vor.u32 1.1754944e-38, %v2103
    %v2105 = vsel %vm2102, %v2104, %v2100
    %v2106 = vmul.f32 1.0, %v2105
    %v2107 = vmul.f32 %v2106, %v1878
    %v2108 = vtanh.pop %v2087
    %2110 = vrot.lane.b32.xlu0 %v2108, 64
    %v2111 = vpop.permute.xlu0 %2110
    %v2113 = vmul.f32 %v277, %v2111
    %v2114 = vadd.f32 %v2107, %v2113
    %v2115 = vtanh.pop %v2114
    %2117 = vrot.lane.b32.xlu0 %v2115, 32
    %v2118 = vpop.permute.xlu0 %2117
    %v2120 = vmul.f32 %v2106, %v2118
    %v2121 = vmul.f32 %v2120, %v939
    %2123 = vrot.lane.b32.xlu0 %v2121, 96
    %v2124 = vpop.permute.xlu0 %2123
    %v2126 = vsel %vm713, %v2124, 0.0
    %2127 = vadd.xlane.f32.xlu0 %v2126
    %v2128 = vpop.xlane.xlu0 %2127
    %s2129 = scalar_lea.vmem [#allocation2], 6
    %v2130 = vld [vmem:[%s2129] ss:$8 sm:$0xf]
    %v2131 = vld [vmem:[%s2129] ss:$8 sm:$0xf0]
    %v2132 = vor.u32 %v2130, %v2131
    %2134 = vrot.lane.b32.xlu0 %v2120, 96
    %v2135 = vpop.permute.xlu0 %2134
    %v2136 = vsel %vm713, %v2135, 0
    %2138 = vmatpush.msra.mxu0 0.0
    %2139 = vmatpush.msra.mxu0 0.0
    %2140 = vmatpush.msra.mxu0 0.0
    %2141 = vmatpush.msra.mxu0 0.0
    %2142 = vmatpush.msra.mxu0 0.0
    %2143 = vmatpush.msra.mxu0 0.0
    %2144 = vmatpush.msra.mxu0 0.0
    %2145 = vmatpush.msra.mxu0 0.0
    %2146 = vmatpush.msra.mxu0 0.0
    %2147 = vmatpush.msra.mxu0 0.0
    %2148 = vmatpush.msra.mxu0 0.0
    %2149 = vmatpush.msra.mxu0 0.0
    %v2150 = vand.u32 %v708, 4294901760
    %2151 = vmatpush.msra.mxu0 %v2150
    %v2152 = vand.u32 %v707, 4294901760
    %2153 = vmatpush.msra.mxu0 %v2152
    %v2154 = vand.u32 %v706, 4294901760
    %2155 = vmatpush.msra.mxu0 %v2154
    %v2156 = vand.u32 %v705, 4294901760
    %2157 = vmatpush.msra.mxu0 %v2156
    %v2158 = vand.u32 %v2136, 4294901760
    %v2159 = vsub.f32 %v2136, %v2158
    %v2160 = vand.u32 %v2159, 4294901760
    %v2161 = vsub.f32 %v2159, %v2160
    %v2162 = vand.u32 %v2161, 4294901760
    %2163 = vmatmul.f32.gmra.mxu0 %v2162
    %v2164 = vpop.f32.mrf.mxu0
    %v2165 = vadd.f32 0.0, %v2164
    %2166 = vdwg.mxu0
    %2167 = vmatpush.msra.mxu0 0.0
    %2168 = vmatpush.msra.mxu0 0.0
    %2169 = vmatpush.msra.mxu0 0.0
    %2170 = vmatpush.msra.mxu0 0.0
    %2171 = vmatpush.msra.mxu0 0.0
    %2172 = vmatpush.msra.mxu0 0.0
    %2173 = vmatpush.msra.mxu0 0.0
    %2174 = vmatpush.msra.mxu0 0.0
    %2175 = vmatpush.msra.mxu0 0.0
    %2176 = vmatpush.msra.mxu0 0.0
    %2177 = vmatpush.msra.mxu0 0.0
    %2178 = vmatpush.msra.mxu0 0.0
    %v2179 = vand.u32 %v708, 4294901760
    %v2180 = vsub.f32 %v708, %v2179
    %v2181 = vand.u32 %v2180, 4294901760
    %v2182 = vsub.f32 %v2180, %v2181
    %v2183 = vand.u32 %v2182, 4294901760
    %2184 = vmatpush.msra.mxu0 %v2183
    %v2185 = vand.u32 %v707, 4294901760
    %v2186 = vsub.f32 %v707, %v2185
    %v2187 = vand.u32 %v2186, 4294901760
    %v2188 = vsub.f32 %v2186, %v2187
    %v2189 = vand.u32 %v2188, 4294901760
    %2190 = vmatpush.msra.mxu0 %v2189
    %v2191 = vand.u32 %v706, 4294901760
    %v2192 = vsub.f32 %v706, %v2191
    %v2193 = vand.u32 %v2192, 4294901760
    %v2194 = vsub.f32 %v2192, %v2193
    %v2195 = vand.u32 %v2194, 4294901760
    %2196 = vmatpush.msra.mxu0 %v2195
    %v2197 = vand.u32 %v705, 4294901760
    %v2198 = vsub.f32 %v705, %v2197
    %v2199 = vand.u32 %v2198, 4294901760
    %v2200 = vsub.f32 %v2198, %v2199
    %v2201 = vand.u32 %v2200, 4294901760
    %2202 = vmatpush.msra.mxu0 %v2201
    %v2203 = vand.u32 %v2136, 4294901760
    %2204 = vmatmul.f32.gmra.mxu0 %v2203
    %v2205 = vpop.f32.mrf.mxu0
    %v2206 = vadd.f32 %v2165, %v2205
    %2207 = vdwg.mxu0
    %2208 = vmatpush.msra.mxu0 0.0
    %2209 = vmatpush.msra.mxu0 0.0
    %2210 = vmatpush.msra.mxu0 0.0
    %2211 = vmatpush.msra.mxu0 0.0
    %2212 = vmatpush.msra.mxu0 0.0
    %2213 = vmatpush.msra.mxu0 0.0
    %2214 = vmatpush.msra.mxu0 0.0
    %2215 = vmatpush.msra.mxu0 0.0
    %2216 = vmatpush.msra.mxu0 0.0
    %2217 = vmatpush.msra.mxu0 0.0
    %2218 = vmatpush.msra.mxu0 0.0
    %2219 = vmatpush.msra.mxu0 0.0
    %v2220 = vand.u32 %v708, 4294901760
    %v2221 = vsub.f32 %v708, %v2220
    %2222 = vmatpush.msra.mxu0 %v2221
    %v2223 = vand.u32 %v707, 4294901760
    %v2224 = vsub.f32 %v707, %v2223
    %2225 = vmatpush.msra.mxu0 %v2224
    %v2226 = vand.u32 %v706, 4294901760
    %v2227 = vsub.f32 %v706, %v2226
    %2228 = vmatpush.msra.mxu0 %v2227
    %v2229 = vand.u32 %v705, 4294901760
    %v2230 = vsub.f32 %v705, %v2229
    %2231 = vmatpush.msra.mxu0 %v2230
    %v2232 = vand.u32 %v2136, 4294901760
    %v2233 = vsub.f32 %v2136, %v2232
    %2234 = vmatmul.f32.gmra.mxu0 %v2233
    %v2235 = vpop.f32.mrf.mxu0
    %v2236 = vadd.f32 %v2206, %v2235
    %2237 = vdwg.mxu0
    %2238 = vmatpush.msra.mxu0 0.0
    %2239 = vmatpush.msra.mxu0 0.0
    %2240 = vmatpush.msra.mxu0 0.0
    %2241 = vmatpush.msra.mxu0 0.0
    %2242 = vmatpush.msra.mxu0 0.0
    %2243 = vmatpush.msra.mxu0 0.0
    %2244 = vmatpush.msra.mxu0 0.0
    %2245 = vmatpush.msra.mxu0 0.0
    %2246 = vmatpush.msra.mxu0 0.0
    %2247 = vmatpush.msra.mxu0 0.0
    %2248 = vmatpush.msra.mxu0 0.0
    %2249 = vmatpush.msra.mxu0 0.0
    %v2250 = vand.u32 %v708, 4294901760
    %2251 = vmatpush.msra.mxu0 %v2250
    %v2252 = vand.u32 %v707, 4294901760
    %2253 = vmatpush.msra.mxu0 %v2252
    %v2254 = vand.u32 %v706, 4294901760
    %2255 = vmatpush.msra.mxu0 %v2254
    %v2256 = vand.u32 %v705, 4294901760
    %2257 = vmatpush.msra.mxu0 %v2256
    %v2258 = vand.u32 %v2136, 4294901760
    %v2259 = vsub.f32 %v2136, %v2258
    %v2260 = vand.u32 %v2259, 4294901760
    %2261 = vmatmul.f32.gmra.mxu0 %v2260
    %v2262 = vpop.f32.mrf.mxu0
    %v2263 = vadd.f32 %v2236, %v2262
    %2264 = vdwg.mxu0
    %2265 = vmatpush.msra.mxu0 0.0
    %2266 = vmatpush.msra.mxu0 0.0
    %2267 = vmatpush.msra.mxu0 0.0
    %2268 = vmatpush.msra.mxu0 0.0
    %2269 = vmatpush.msra.mxu0 0.0
    %2270 = vmatpush.msra.mxu0 0.0
    %2271 = vmatpush.msra.mxu0 0.0
    %2272 = vmatpush.msra.mxu0 0.0
    %2273 = vmatpush.msra.mxu0 0.0
    %2274 = vmatpush.msra.mxu0 0.0
    %2275 = vmatpush.msra.mxu0 0.0
    %2276 = vmatpush.msra.mxu0 0.0
    %v2277 = vand.u32 %v708, 4294901760
    %v2278 = vsub.f32 %v708, %v2277
    %v2279 = vand.u32 %v2278, 4294901760
    %2280 = vmatpush.msra.mxu0 %v2279
    %v2281 = vand.u32 %v707, 4294901760
    %v2282 = vsub.f32 %v707, %v2281
    %v2283 = vand.u32 %v2282, 4294901760
    %2284 = vmatpush.msra.mxu0 %v2283
    %v2285 = vand.u32 %v706, 4294901760
    %v2286 = vsub.f32 %v706, %v2285
    %v2287 = vand.u32 %v2286, 4294901760
    %2288 = vmatpush.msra.mxu0 %v2287
    %v2289 = vand.u32 %v705, 4294901760
    %v2290 = vsub.f32 %v705, %v2289
    %v2291 = vand.u32 %v2290, 4294901760
    %2292 = vmatpush.msra.mxu0 %v2291
    %v2293 = vand.u32 %v2136, 4294901760
    %2294 = vmatmul.f32.gmra.mxu0 %v2293
    %v2295 = vpop.f32.mrf.mxu0
    %v2296 = vadd.f32 %v2263, %v2295
    %2297 = vdwg.mxu0
    %2298 = vmatpush.msra.mxu0 0.0
    %2299 = vmatpush.msra.mxu0 0.0
    %2300 = vmatpush.msra.mxu0 0.0
    %2301 = vmatpush.msra.mxu0 0.0
    %2302 = vmatpush.msra.mxu0 0.0
    %2303 = vmatpush.msra.mxu0 0.0
    %2304 = vmatpush.msra.mxu0 0.0
    %2305 = vmatpush.msra.mxu0 0.0
    %2306 = vmatpush.msra.mxu0 0.0
    %2307 = vmatpush.msra.mxu0 0.0
    %2308 = vmatpush.msra.mxu0 0.0
    %2309 = vmatpush.msra.mxu0 0.0
    %v2310 = vand.u32 %v708, 4294901760
    %2311 = vmatpush.msra.mxu0 %v2310
    %v2312 = vand.u32 %v707, 4294901760
    %2313 = vmatpush.msra.mxu0 %v2312
    %v2314 = vand.u32 %v706, 4294901760
    %2315 = vmatpush.msra.mxu0 %v2314
    %v2316 = vand.u32 %v705, 4294901760
    %2317 = vmatpush.msra.mxu0 %v2316
    %v2318 = vand.u32 %v2136, 4294901760
    %2319 = vmatmul.f32.gmra.mxu0 %v2318
    %v2320 = vpop.f32.mrf.mxu0
    %v2321 = vadd.f32 %v2296, %v2320
    %2322 = vdwg.mxu0
    %v2323 = vadd.f32 %v2132, %v2321
    %v2324 = vxor.u32 %v2323, 2147483648
    %v2325 = vmul.f32 %v2324, 1.442695
    %v2326 = vpow.pop %v2325
    %v2327 = vadd.f32 %v2326, 1.0
    %v2328 = vrcp.pop %v2327
    %v2329 = vmul.f32 %v2327, %v2328
    %v2330 = vsub.f32 1.0, %v2329
    %v2331 = vmul.f32 %v2328, %v2330
    %v2332 = vadd.f32 %v2328, %v2331
    %vm2333 = vweird.f32 %v2327
    %vm2334 = vweird.f32 %v2328
    %vm2335 = vmor %vm2333, %vm2334
    %v2336 = vsel %vm2335, %v2328, %v2332
    %v2337 = vand.u32 2147483647, %v2327
    %vm2338 = vcmp.eq.f32.partialorder %v2337, 8.507059e+37
    %v2339 = vand.u32 %v2327, 2147483648
    %v2340 = vor.u32 1.1754944e-38, %v2339
    %v2341 = vsel %vm2338, %v2340, %v2336
    %v2342 = vmul.f32 1.0, %v2341
    %v2343 = vmul.f32 %v2342, %v2114
    %v2344 = vtanh.pop %v2323
    %2346 = vrot.lane.b32.xlu0 %v2344, 64
    %v2347 = vpop.permute.xlu0 %2346
    %v2349 = vmul.f32 %v277, %v2347
    %v2350 = vadd.f32 %v2343, %v2349
    %v2351 = vtanh.pop %v2350
    %2353 = vrot.lane.b32.xlu0 %v2351, 32
    %v2354 = vpop.permute.xlu0 %2353
    %v2356 = vmul.f32 %v2342, %v2354
    %v2357 = vmul.f32 %v2356, %v939
    %2359 = vrot.lane.b32.xlu0 %v2357, 96
    %v2360 = vpop.permute.xlu0 %2359
    %v2362 = vsel %vm713, %v2360, 0.0
    %2363 = vadd.xlane.f32.xlu0 %v2362
    %v2364 = vpop.xlane.xlu0 %2363
    %s2365 = scalar_lea.vmem [#allocation2], 7
    %v2366 = vld [vmem:[%s2365] ss:$8 sm:$0xf]
    %v2367 = vld [vmem:[%s2365] ss:$8 sm:$0xf0]
    %v2368 = vor.u32 %v2366, %v2367
    %2370 = vrot.lane.b32.xlu0 %v2356, 96
    %v2371 = vpop.permute.xlu0 %2370
    %v2372 = vsel %vm713, %v2371, 0
    %2374 = vmatpush.msra.mxu0 0.0
    %2375 = vmatpush.msra.mxu0 0.0
    %2376 = vmatpush.msra.mxu0 0.0
    %2377 = vmatpush.msra.mxu0 0.0
    %2378 = vmatpush.msra.mxu0 0.0
    %2379 = vmatpush.msra.mxu0 0.0
    %2380 = vmatpush.msra.mxu0 0.0
    %2381 = vmatpush.msra.mxu0 0.0
    %2382 = vmatpush.msra.mxu0 0.0
    %2383 = vmatpush.msra.mxu0 0.0
    %2384 = vmatpush.msra.mxu0 0.0
    %2385 = vmatpush.msra.mxu0 0.0
    %v2386 = vand.u32 %v708, 4294901760
    %2387 = vmatpush.msra.mxu0 %v2386
    %v2388 = vand.u32 %v707, 4294901760
    %2389 = vmatpush.msra.mxu0 %v2388
    %v2390 = vand.u32 %v706, 4294901760
    %2391 = vmatpush.msra.mxu0 %v2390
    %v2392 = vand.u32 %v705, 4294901760
    %2393 = vmatpush.msra.mxu0 %v2392
    %v2394 = vand.u32 %v2372, 4294901760
    %v2395 = vsub.f32 %v2372, %v2394
    %v2396 = vand.u32 %v2395, 4294901760
    %v2397 = vsub.f32 %v2395, %v2396
    %v2398 = vand.u32 %v2397, 4294901760
    %2399 = vmatmul.f32.gmra.mxu0 %v2398
    %v2400 = vpop.f32.mrf.mxu0
    %v2401 = vadd.f32 0.0, %v2400
    %2402 = vdwg.mxu0
    %2403 = vmatpush.msra.mxu0 0.0
    %2404 = vmatpush.msra.mxu0 0.0
    %2405 = vmatpush.msra.mxu0 0.0
    %2406 = vmatpush.msra.mxu0 0.0
    %2407 = vmatpush.msra.mxu0 0.0
    %2408 = vmatpush.msra.mxu0 0.0
    %2409 = vmatpush.msra.mxu0 0.0
    %2410 = vmatpush.msra.mxu0 0.0
    %2411 = vmatpush.msra.mxu0 0.0
    %2412 = vmatpush.msra.mxu0 0.0
    %2413 = vmatpush.msra.mxu0 0.0
    %2414 = vmatpush.msra.mxu0 0.0
    %v2415 = vand.u32 %v708, 4294901760
    %v2416 = vsub.f32 %v708, %v2415
    %v2417 = vand.u32 %v2416, 4294901760
    %v2418 = vsub.f32 %v2416, %v2417
    %v2419 = vand.u32 %v2418, 4294901760
    %2420 = vmatpush.msra.mxu0 %v2419
    %v2421 = vand.u32 %v707, 4294901760
    %v2422 = vsub.f32 %v707, %v2421
    %v2423 = vand.u32 %v2422, 4294901760
    %v2424 = vsub.f32 %v2422, %v2423
    %v2425 = vand.u32 %v2424, 4294901760
    %2426 = vmatpush.msra.mxu0 %v2425
    %v2427 = vand.u32 %v706, 4294901760
    %v2428 = vsub.f32 %v706, %v2427
    %v2429 = vand.u32 %v2428, 4294901760
    %v2430 = vsub.f32 %v2428, %v2429
    %v2431 = vand.u32 %v2430, 4294901760
    %2432 = vmatpush.msra.mxu0 %v2431
    %v2433 = vand.u32 %v705, 4294901760
    %v2434 = vsub.f32 %v705, %v2433
    %v2435 = vand.u32 %v2434, 4294901760
    %v2436 = vsub.f32 %v2434, %v2435
    %v2437 = vand.u32 %v2436, 4294901760
    %2438 = vmatpush.msra.mxu0 %v2437
    %v2439 = vand.u32 %v2372, 4294901760
    %2440 = vmatmul.f32.gmra.mxu0 %v2439
    %v2441 = vpop.f32.mrf.mxu0
    %v2442 = vadd.f32 %v2401, %v2441
    %2443 = vdwg.mxu0
    %2444 = vmatpush.msra.mxu0 0.0
    %2445 = vmatpush.msra.mxu0 0.0
    %2446 = vmatpush.msra.mxu0 0.0
    %2447 = vmatpush.msra.mxu0 0.0
    %2448 = vmatpush.msra.mxu0 0.0
    %2449 = vmatpush.msra.mxu0 0.0
    %2450 = vmatpush.msra.mxu0 0.0
    %2451 = vmatpush.msra.mxu0 0.0
    %2452 = vmatpush.msra.mxu0 0.0
    %2453 = vmatpush.msra.mxu0 0.0
    %2454 = vmatpush.msra.mxu0 0.0
    %2455 = vmatpush.msra.mxu0 0.0
    %v2456 = vand.u32 %v708, 4294901760
    %v2457 = vsub.f32 %v708, %v2456
    %2458 = vmatpush.msra.mxu0 %v2457
    %v2459 = vand.u32 %v707, 4294901760
    %v2460 = vsub.f32 %v707, %v2459
    %2461 = vmatpush.msra.mxu0 %v2460
    %v2462 = vand.u32 %v706, 4294901760
    %v2463 = vsub.f32 %v706, %v2462
    %2464 = vmatpush.msra.mxu0 %v2463
    %v2465 = vand.u32 %v705, 4294901760
    %v2466 = vsub.f32 %v705, %v2465
    %2467 = vmatpush.msra.mxu0 %v2466
    %v2468 = vand.u32 %v2372, 4294901760
    %v2469 = vsub.f32 %v2372, %v2468
    %2470 = vmatmul.f32.gmra.mxu0 %v2469
    %v2471 = vpop.f32.mrf.mxu0
    %v2472 = vadd.f32 %v2442, %v2471
    %2473 = vdwg.mxu0
    %2474 = vmatpush.msra.mxu0 0.0
    %2475 = vmatpush.msra.mxu0 0.0
    %2476 = vmatpush.msra.mxu0 0.0
    %2477 = vmatpush.msra.mxu0 0.0
    %2478 = vmatpush.msra.mxu0 0.0
    %2479 = vmatpush.msra.mxu0 0.0
    %2480 = vmatpush.msra.mxu0 0.0
    %2481 = vmatpush.msra.mxu0 0.0
    %2482 = vmatpush.msra.mxu0 0.0
    %2483 = vmatpush.msra.mxu0 0.0
    %2484 = vmatpush.msra.mxu0 0.0
    %2485 = vmatpush.msra.mxu0 0.0
    %v2486 = vand.u32 %v708, 4294901760
    %2487 = vmatpush.msra.mxu0 %v2486
    %v2488 = vand.u32 %v707, 4294901760
    %2489 = vmatpush.msra.mxu0 %v2488
    %v2490 = vand.u32 %v706, 4294901760
    %2491 = vmatpush.msra.mxu0 %v2490
    %v2492 = vand.u32 %v705, 4294901760
    %2493 = vmatpush.msra.mxu0 %v2492
    %v2494 = vand.u32 %v2372, 4294901760
    %v2495 = vsub.f32 %v2372, %v2494
    %v2496 = vand.u32 %v2495, 4294901760
    %2497 = vmatmul.f32.gmra.mxu0 %v2496
    %v2498 = vpop.f32.mrf.mxu0
    %v2499 = vadd.f32 %v2472, %v2498
    %2500 = vdwg.mxu0
    %2501 = vmatpush.msra.mxu0 0.0
    %2502 = vmatpush.msra.mxu0 0.0
    %2503 = vmatpush.msra.mxu0 0.0
    %2504 = vmatpush.msra.mxu0 0.0
    %2505 = vmatpush.msra.mxu0 0.0
    %2506 = vmatpush.msra.mxu0 0.0
    %2507 = vmatpush.msra.mxu0 0.0
    %2508 = vmatpush.msra.mxu0 0.0
    %2509 = vmatpush.msra.mxu0 0.0
    %2510 = vmatpush.msra.mxu0 0.0
    %2511 = vmatpush.msra.mxu0 0.0
    %2512 = vmatpush.msra.mxu0 0.0
    %v2513 = vand.u32 %v708, 4294901760
    %v2514 = vsub.f32 %v708, %v2513
    %v2515 = vand.u32 %v2514, 4294901760
    %2516 = vmatpush.msra.mxu0 %v2515
    %v2517 = vand.u32 %v707, 4294901760
    %v2518 = vsub.f32 %v707, %v2517
    %v2519 = vand.u32 %v2518, 4294901760
    %2520 = vmatpush.msra.mxu0 %v2519
    %v2521 = vand.u32 %v706, 4294901760
    %v2522 = vsub.f32 %v706, %v2521
    %v2523 = vand.u32 %v2522, 4294901760
    %2524 = vmatpush.msra.mxu0 %v2523
    %v2525 = vand.u32 %v705, 4294901760
    %v2526 = vsub.f32 %v705, %v2525
    %v2527 = vand.u32 %v2526, 4294901760
    %2528 = vmatpush.msra.mxu0 %v2527
    %v2529 = vand.u32 %v2372, 4294901760
    %2530 = vmatmul.f32.gmra.mxu0 %v2529
    %v2531 = vpop.f32.mrf.mxu0
    %v2532 = vadd.f32 %v2499, %v2531
    %2533 = vdwg.mxu0
    %2534 = vmatpush.msra.mxu0 0.0
    %2535 = vmatpush.msra.mxu0 0.0
    %2536 = vmatpush.msra.mxu0 0.0
    %2537 = vmatpush.msra.mxu0 0.0
    %2538 = vmatpush.msra.mxu0 0.0
    %2539 = vmatpush.msra.mxu0 0.0
    %2540 = vmatpush.msra.mxu0 0.0
    %2541 = vmatpush.msra.mxu0 0.0
    %2542 = vmatpush.msra.mxu0 0.0
    %2543 = vmatpush.msra.mxu0 0.0
    %2544 = vmatpush.msra.mxu0 0.0
    %2545 = vmatpush.msra.mxu0 0.0
    %v2546 = vand.u32 %v708, 4294901760
    %2547 = vmatpush.msra.mxu0 %v2546
    %v2548 = vand.u32 %v707, 4294901760
    %2549 = vmatpush.msra.mxu0 %v2548
    %v2550 = vand.u32 %v706, 4294901760
    %2551 = vmatpush.msra.mxu0 %v2550
    %v2552 = vand.u32 %v705, 4294901760
    %2553 = vmatpush.msra.mxu0 %v2552
    %v2554 = vand.u32 %v2372, 4294901760
    %2555 = vmatmul.f32.gmra.mxu0 %v2554
    %v2556 = vpop.f32.mrf.mxu0
    %v2557 = vadd.f32 %v2532, %v2556
    %2558 = vdwg.mxu0
    %v2559 = vadd.f32 %v2368, %v2557
    %v2560 = vxor.u32 %v2559, 2147483648
    %v2561 = vmul.f32 %v2560, 1.442695
    %v2562 = vpow.pop %v2561
    %v2563 = vadd.f32 %v2562, 1.0
    %v2564 = vrcp.pop %v2563
    %v2565 = vmul.f32 %v2563, %v2564
    %v2566 = vsub.f32 1.0, %v2565
    %v2567 = vmul.f32 %v2564, %v2566
    %v2568 = vadd.f32 %v2564, %v2567
    %vm2569 = vweird.f32 %v2563
    %vm2570 = vweird.f32 %v2564
    %vm2571 = vmor %vm2569, %vm2570
    %v2572 = vsel %vm2571, %v2564, %v2568
    %v2573 = vand.u32 2147483647, %v2563
    %vm2574 = vcmp.eq.f32.partialorder %v2573, 8.507059e+37
    %v2575 = vand.u32 %v2563, 2147483648
    %v2576 = vor.u32 1.1754944e-38, %v2575
    %v2577 = vsel %vm2574, %v2576, %v2572
    %v2578 = vmul.f32 1.0, %v2577
    %v2579 = vmul.f32 %v2578, %v2350
    %v2580 = vtanh.pop %v2559
    %2582 = vrot.lane.b32.xlu0 %v2580, 64
    %v2583 = vpop.permute.xlu0 %2582
    %v2585 = vmul.f32 %v277, %v2583
    %v2586 = vadd.f32 %v2579, %v2585
    %v2587 = vtanh.pop %v2586
    %2589 = vrot.lane.b32.xlu0 %v2587, 32
    %v2590 = vpop.permute.xlu0 %2589
    %v2592 = vmul.f32 %v2578, %v2590
    %v2593 = vmul.f32 %v2592, %v939
    %2595 = vrot.lane.b32.xlu0 %v2593, 96
    %v2596 = vpop.permute.xlu0 %2595
    %v2598 = vsel %vm713, %v2596, 0.0
    %2599 = vadd.xlane.f32.xlu0 %v2598
    %v2600 = vpop.xlane.xlu0 %2599
    %2602 = vrot.lane.b32.xlu0 %v1412, 32
    %v2603 = vpop.permute.xlu0 %2602
    %2605 = vrot.lane.b32.xlu0 %v1648, 64
    %v2606 = vpop.permute.xlu0 %2605
    %2609 = vrot.lane.b32.xlu0 %v2356, 32
    %v2610 = vpop.permute.xlu0 %2609
    %2613 = vrot.lane.b32.xlu0 %v2592, 64
    %v2614 = vpop.permute.xlu0 %2613
    %v2616 = vsel %vm713, %v955, %v1176
    %vm2617 = vcmask 523264
    %v2618 = vsel %vm2617, %v2616, %v2603
    %v2619 = vsel %vm696, %v2618, %v2606
    %v2620 = vsel %vm713, %v1899, %v2120
    %v2621 = vsel %vm2617, %v2620, %v2610
    %v2622 = vsel %vm696, %v2621, %v2614
    %2623 = vst [vmem:[%s10] sm:$0xff] %v2619
    %2624 = vst [vmem:[%s10 + $0x8] sm:$0xff] %v2622
    %2626 = vrot.lane.b32.xlu0 %v1170, 32
    %v2627 = vpop.permute.xlu0 %2626
    %2630 = vrot.lane.b32.xlu0 %v1406, 64
    %v2631 = vpop.permute.xlu0 %2630
    %2634 = vrot.lane.b32.xlu0 %v1642, 96
    %v2635 = vpop.permute.xlu0 %2634
    %2638 = vrot.lane.b32.xlu0 %v2114, 32
    %v2639 = vpop.permute.xlu0 %2638
    %2642 = vrot.lane.b32.xlu0 %v2350, 64
    %v2643 = vpop.permute.xlu0 %2642
    %2646 = vrot.lane.b32.xlu0 %v2586, 96
    %v2647 = vpop.permute.xlu0 %2646
    %v2649 = vsel %vm713, %v929, %v2627
    %v2650 = vsel %vm2617, %v2649, %v2631
    %v2651 = vsel %vm696, %v2650, %v2635
    %v2652 = vsel %vm713, %v1878, %v2639
    %v2653 = vsel %vm2617, %v2652, %v2643
    %v2654 = vsel %vm696, %v2653, %v2647
    %2655 = vst [vmem:[%s11] sm:$0xff] %v2651
    %2656 = vst [vmem:[%s11 + $0x8] sm:$0xff] %v2654
    %vm2657 = vcmask 7168
    %v2658 = vsel %vm2657, %v948, %v1184
    %vm2659 = vcmask 15360
    %v2660 = vsel %vm2659, %v2658, %v1420
    %vm2661 = vcmask 23552
    %v2662 = vsel %vm2661, %v2660, %v1656
    %vm2663 = vcmask 31744
    %v2664 = vsel %vm2663, %v2662, %v1892
    %vm2665 = vcmask 39936
    %v2666 = vsel %vm2665, %v2664, %v2128
    %vm2667 = vcmask 48128
    %v2668 = vsel %vm2667, %v2666, %v2364
    %v2669 = vsel %vm105, %v2668, %v2600
    %v2670 = vld [vmem:[#allocation3] sm:$0x1]
    %v2672 = vperm.slane %v2670, 0
    %2673 = vset.pattern.permute.xlu0 0
    %2674 = vperm.xlu0 %2673, %v2672
    %v2675 = vpop.permute.xlu0 %2674
    %v2677 = vadd.f32 %v2669, %v2675
    %vm2678 = vcmask 64512
    %2679 = vst.msk [vmem:[#allocation12] sm:$0xff] %vm2678, %v2677
    // Predicated region
    $region54: #{model_forward.1} parent=1 // pred_check
      _
    $region55: #{model_forward.1} parent=1 // pred_check_branch
      %2681 = sbr.rel (0) target = $region57
    $region56: #{model_forward.1} parent=1 // pred_region
      %2683 = vsyncadd [#allocation6], 0
      %s2685 = sshll.u32 [#allocation12], 4
      %s2686 = int_to_ptr.vmem [resolvable:$true] %s2685
      %s2687 = sshll.u32 %s9, 4
      %s2688 = int_to_ptr.hbm [resolvable:$true] %s2687
      %2690 = dma.vmem_to_hbm [thread:$0]  %s2686, 128, %s2688, [#allocation6]
    $region57: #{model_forward.1} parent=1 // pred_fallthru
      _
    // Predicated region
    $region58: #{model_forward.1} parent=1 // pred_check
      _
    $region59: #{model_forward.1} parent=1 // pred_check_branch
      %2692 = sbr.rel (0) target = $region61
    $region60: #{model_forward.1} parent=1 // pred_region
      _
    $region61: #{model_forward.1} parent=1 // pred_fallthru
      _
    // Predicated region
    $region62: #{model_forward.1} parent=1 // pred_check
      _
    $region63: #{model_forward.1} parent=1 // pred_check_branch
      %2694 = sbr.rel (0) target = $region65
    $region64: #{model_forward.1} parent=1 // pred_region
      _
    $region65: #{model_forward.1} parent=1 // pred_fallthru
      _
    // Predicated region
    $region66: #{model_forward.1} parent=1 // pred_check
      _
    $region67: #{model_forward.1} parent=1 // pred_check_branch
      %2696 = sbr.rel (0) target = $region69
    $region68: #{model_forward.1} parent=1 // pred_region
      %2698 = dma.done [#allocation6], 128
    $region69: #{model_forward.1} parent=1 // pred_fallthru
      _
    // Predicated region
    $region70: #{model_forward.1} parent=1 // pred_check
      _
    $region71: #{model_forward.1} parent=1 // pred_check_branch
      %2700 = sbr.rel (0) target = $region73
    $region72: #{model_forward.1} parent=1 // pred_region
      _
    $region73: #{model_forward.1} parent=1 // pred_fallthru
      _
    // Predicated region
    $region74: #{model_forward.1} parent=1 // pred_check
      _
    $region75: #{model_forward.1} parent=1 // pred_check_branch
      %2702 = sbr.rel (0) target = $region77
    $region76: #{model_forward.1} parent=1 // pred_region
      _
    $region77: #{model_forward.1} parent=1 // pred_fallthru
      _
    %2703 = vsyncpa [#allocation5], 1
    %2704 = vsyncpa [#allocation8], 1
    %2705 = vsyncpa [#allocation11], 1
    %2706 = vsyncpa [#allocation6], 1

</llo_original>
